<compile_context>
chip_gen: v7x
topology: tpu7x:2x2x1
jax: 0.10.0
libtpu: 0.0.40
codegen_flags: <defaults>
</compile_context>

<pallas_src>
from functools import partial

import numpy as np
import jax
import jax.numpy as jnp
from jax.experimental import pallas as pl
from jax.experimental.pallas import tpu as pltpu

BN_EPS = 1e-5


# ----------------------------------------------------------------------------
# Kernel (one image per grid step)
# ----------------------------------------------------------------------------
def _inverted_residual_kernel(x_ref, w1_ref, b1_ref, w2_ref, b2_ref,
                              w3_ref, b3_ref, out_ref, *, W):
    """Spatial-in-lanes layout.

    x_ref  : (Cin, H*W)          bf16, channels on sublanes, pixels on lanes
    w1_ref : (hidden, Cin)       bf16, BN1 scale folded in
    w2_ref : (9, hidden, hidden) bf16, block-diagonal per-tap grouped weights
                                 (BN2 scale folded in), [tap, c_out, c_in]
    w3_ref : (Cout, hidden)      bf16, BN3 scale folded in
    b*_ref : (C, 1)              f32 folded BN bias
    out_ref: (Cout, H*W)         f32; lanes with y >= H-2 or x >= W-2 are
                                 garbage and sliced off in the wrapper
    """
    HW = x_ref.shape[-1]
    cdt = w1_ref.dtype  # bf16 MXU operand dtype

    # ---- Stage 1: 1x1 expand -> +bias -> ReLU6 (f32 epilogue) ------------
    h1 = jnp.dot(w1_ref[...], x_ref[...], preferred_element_type=jnp.float32)
    h1 = jnp.clip(h1 + b1_ref[...], 0.0, 6.0)                 # (hidden, HW)

    # ---- Stage 2: grouped 3x3 conv as 9 lane-shifted matmuls -------------
    # out[:, y*W + x] = sum_{dy,dx} W2bd[dy*3+dx] @ h1[:, (y+dy)*W + (x+dx)]
    acc = jnp.dot(w2_ref[0], h1.astype(cdt),
                  preferred_element_type=jnp.float32)          # tap (0,0)
    for dy in range(3):
        for dx in range(3):
            if dy == 0 and dx == 0:
                continue
            off = dy * W + dx
            # shifted[:, l] = h1[:, l + off]  (lane roll -> XLU slot)
            shifted = pltpu.roll(h1, HW - off, axis=1)
            acc = acc + jnp.dot(w2_ref[dy * 3 + dx], shifted.astype(cdt),
                                preferred_element_type=jnp.float32)
    h2 = jnp.clip(acc + b2_ref[...], 0.0, 6.0)                 # (hidden, HW)

    # ---- Stage 3: 1x1 project -> +bias -> ReLU6; lane-dense store --------
    h3 = jnp.dot(w3_ref[...], h2.astype(cdt),
                 preferred_element_type=jnp.float32)           # (Cout, HW)
    out_ref[...] = jnp.clip(h3 + b3_ref[...], 0.0, 6.0).astype(out_ref.dtype)


# ----------------------------------------------------------------------------
# Wrapper
# ----------------------------------------------------------------------------
@jax.jit
def inverted_residual_forward(x_nchw, w1_k, b1, w2_bd, b2, w3_k, b3):
    B, cin, H, W = x_nchw.shape
    hidden = w1_k.shape[0]
    cout = w3_k.shape[0]
    HW = H * W
    hout, wout = H - 2, W - 2

    # NCHW -> (B, Cin, H*W): pure reshape, no transpose; bf16 for DMA/MXU.
    x_flat = x_nchw.reshape(B, cin, HW).astype(jnp.bfloat16)

    # FLOPs actually executed (stage 2 counts the dense block-diagonal
    # matmuls, i.e. `groups`x the semantic grouped-conv FLOPs).
    flops = int(B * (2 * HW * cin * hidden
                     + 9 * 2 * HW * hidden * hidden
                     + 2 * HW * hidden * cout))
    bytes_accessed = int(2 * (x_flat.size + w1_k.size + w2_bd.size + w3_k.size)
                         + 4 * (B * cout * HW + b1.size + b2.size + b3.size))

    kernel = partial(_inverted_residual_kernel, W=W)

    out = pl.pallas_call(
        kernel,
        out_shape=jax.ShapeDtypeStruct((B, cout, HW), jnp.float32),
        grid=(B,),
        in_specs=[
            pl.BlockSpec((None, cin, HW), lambda b: (b, 0, 0)),       # x
            pl.BlockSpec((hidden, cin), lambda b: (0, 0)),            # w1
            pl.BlockSpec((hidden, 1), lambda b: (0, 0)),              # b1
            pl.BlockSpec((9, hidden, hidden), lambda b: (0, 0, 0)),   # w2
            pl.BlockSpec((hidden, 1), lambda b: (0, 0)),              # b2
            pl.BlockSpec((cout, hidden), lambda b: (0, 0)),           # w3
            pl.BlockSpec((cout, 1), lambda b: (0, 0)),                # b3
        ],
        out_specs=pl.BlockSpec((None, cout, HW), lambda b: (b, 0, 0)),
        compiler_params=pltpu.CompilerParams(
            dimension_semantics=("parallel",)),
        cost_estimate=pl.CostEstimate(flops=flops, transcendentals=0,
                                      bytes_accessed=bytes_accessed),
    )(x_flat, w1_k, b1, w2_bd, b2, w3_k, b3)

    # (B, Cout, H*W) -> (B, Cout, H, W), drop the 2 garbage rows/cols -> NCHW.
    return out.reshape(B, cout, H, W)[:, :, :hout, :wout]


# ----------------------------------------------------------------------------
# Parameter construction / preparation (host side)
# ----------------------------------------------------------------------------
def init_params(key, in_channels, out_channels, expand_ratio=6):
    hidden = int(round(in_channels * expand_ratio))
    ks = jax.random.split(key, 6)
    w1 = jax.random.normal(ks[0], (hidden, in_channels, 1, 1), jnp.float32) * 0.3
    w2 = jax.random.normal(ks[1], (hidden, hidden // in_channels, 3, 3),
                           jnp.float32) * 0.2
    w3 = jax.random.normal(ks[2], (out_channels, hidden, 1, 1), jnp.float32) * 0.3

    def bn_params(k, c):
        k1, k2, k3, k4 = jax.random.split(k, 4)
        gamma = jax.random.uniform(k1, (c,), jnp.float32, 0.5, 1.5)
        beta = jax.random.normal(k2, (c,), jnp.float32) * 0.1
        rmean = jax.random.normal(k3, (c,), jnp.float32) * 0.1
        rvar = jax.random.uniform(k4, (c,), jnp.float32, 0.5, 1.5)
        return gamma, beta, rmean, rvar

    return dict(w1=w1, w2=w2, w3=w3,
                bn1=bn_params(ks[3], hidden),
                bn2=bn_params(ks[4], hidden),
                bn3=bn_params(ks[5], out_channels))


def _fold_bn(gamma, beta, rmean, rvar, eps=BN_EPS):
    gamma, beta = np.asarray(gamma, np.float32), np.asarray(beta, np.float32)
    rmean, rvar = np.asarray(rmean, np.float32), np.asarray(rvar, np.float32)
    scale = gamma / np.sqrt(rvar + eps)
    bias = beta - rmean * scale
    return scale, bias


def prepare_kernel_params(params, groups):
    """Fold BN (inference mode) scale into the conv weights, build the
    block-diagonal per-tap grouped weights, cast weights to bf16."""
    w1 = np.asarray(params["w1"], np.float32)    # (hidden, cin, 1, 1)
    w2 = np.asarray(params["w2"], np.float32)    # (hidden, hidden//groups, 3, 3)
    w3 = np.asarray(params["w3"], np.float32)    # (cout, hidden, 1, 1)
    hidden, cin = w1.shape[:2]
    cout = w3.shape[0]
    in_per_group = w2.shape[1]
    out_per_group = hidden // groups

    s1, b1 = _fold_bn(*params["bn1"])
    s2, b2 = _fold_bn(*params["bn2"])
    s3, b3 = _fold_bn(*params["bn3"])

    w1_k = w1[:, :, 0, 0] * s1[:, None]          # (hidden, cin)
    w3_k = w3[:, :, 0, 0] * s3[:, None]          # (cout, hidden)

    w2_bd = np.zeros((9, hidden, hidden), np.float32)   # [tap, c_out, c_in]
    for co in range(hidden):
        g = co // out_per_group
        for cil in range(in_per_group):
            ci = g * in_per_group + cil
            for dy in range(3):
                for dx in range(3):
                    w2_bd[dy * 3 + dx, co, ci] = w2[co, cil, dy, dx] * s2[co]

    return (jnp.asarray(w1_k, jnp.bfloat16),
            jnp.asarray(b1.reshape(hidden, 1), jnp.float32),
            jnp.asarray(w2_bd, jnp.bfloat16),
            jnp.asarray(b2.reshape(hidden, 1), jnp.float32),
            jnp.asarray(w3_k, jnp.bfloat16),
            jnp.asarray(b3.reshape(cout, 1), jnp.float32))


# ----------------------------------------------------------------------------
# Pure-JAX f32 reference of the PyTorch module (sanity check)
# ----------------------------------------------------------------------------
def _reference(x, params, groups):
    def bn(v, p):
        g, b, rm, rv = p
        s = g / jnp.sqrt(rv + BN_EPS)
        return v * s[None, :, None, None] + (b - rm * s)[None, :, None, None]

    relu6 = lambda v: jnp.clip(v, 0.0, 6.0)
    dn = ("NCHW", "OIHW", "NCHW")
    hp = jax.lax.conv_general_dilated(x, params["w1"], (1, 1), "VALID",
                                      dimension_numbers=dn,
                                      precision=jax.lax.Precision.HIGHEST)
    hp = relu6(bn(hp, params["bn1"]))
    hp = jax.lax.conv_general_dilated(hp, params["w2"], (1, 1), "VALID",
                                      dimension_numbers=dn,
                                      feature_group_count=groups,
                                      precision=jax.lax.Precision.HIGHEST)
    hp = relu6(bn(hp, params["bn2"]))
    hp = jax.lax.conv_general_dilated(hp, params["w3"], (1, 1), "VALID",
                                      dimension_numbers=dn,
                                      precision=jax.lax.Precision.HIGHEST)
    hp = relu6(bn(hp, params["bn3"]))
    return hp


# ----------------------------------------------------------------------------
if __name__ == "__main__":
    key = jax.random.PRNGKey(0)
    kx, kp = jax.random.split(key)

    B, C_IN, H, W = 2, 4, 16, 16
    C_OUT, EXPAND = 8, 6

    x = jax.random.normal(kx, (B, C_IN, H, W), dtype=jnp.float32)
    params = init_params(kp, C_IN, C_OUT, expand_ratio=EXPAND)
    kparams = prepare_kernel_params(params, groups=C_IN)

    out = jax.block_until_ready(inverted_residual_forward(x, *kparams))

    ref = jax.block_until_ready(_reference(x, params, groups=C_IN))
    assert out.shape == (B, C_OUT, H - 2, W - 2), out.shape
    # Kernel uses bf16 operands (f32 accumulation) vs. f32 HIGHEST reference,
    # so the tolerance is loosened accordingly.
    np.testing.assert_allclose(np.asarray(out), np.asarray(ref),
                               rtol=5e-2, atol=5e-2)

    print("KERNEL_OK")
</pallas_src>

<mosaic_0001>
module attributes {stable_mosaic.version = 11 : i64} {
  func.func @_inverted_residual_kernel(%arg0: i32, %arg1: memref<1x4x256xbf16, #tpu.memory_space<vmem>>, %arg2: memref<24x4xbf16, #tpu.memory_space<vmem>>, %arg3: memref<24x1xf32, #tpu.memory_space<vmem>>, %arg4: memref<9x24x24xbf16, #tpu.memory_space<vmem>>, %arg5: memref<24x1xf32, #tpu.memory_space<vmem>>, %arg6: memref<8x24xbf16, #tpu.memory_space<vmem>>, %arg7: memref<8x1xf32, #tpu.memory_space<vmem>>, %arg8: memref<1x8x256xf32, #tpu.memory_space<vmem>>) attributes {dimension_semantics = [#tpu.dimension_semantics<parallel>], iteration_bounds = array<i64: 2>, scalar_prefetch = 0 : i64, scratch_operands = 0 : i64, tpu.core_type = #tpu.core_type<tc>, window_params = [{transform_indices = @transform_0, window_bounds = array<i64: 1, 4, 256>}, {pipeline_mode = #tpu.pipeline_mode<synchronous>, transform_indices = @transform_1, window_bounds = array<i64: 24, 4>}, {pipeline_mode = #tpu.pipeline_mode<synchronous>, transform_indices = @transform_2, window_bounds = array<i64: 24, 1>}, {pipeline_mode = #tpu.pipeline_mode<synchronous>, transform_indices = @transform_3, window_bounds = array<i64: 9, 24, 24>}, {pipeline_mode = #tpu.pipeline_mode<synchronous>, transform_indices = @transform_4, window_bounds = array<i64: 24, 1>}, {pipeline_mode = #tpu.pipeline_mode<synchronous>, transform_indices = @transform_5, window_bounds = array<i64: 8, 24>}, {pipeline_mode = #tpu.pipeline_mode<synchronous>, transform_indices = @transform_6, window_bounds = array<i64: 8, 1>}, {transform_indices = @transform_7, window_bounds = array<i64: 1, 8, 256>}]} {
    %c0 = arith.constant 0 : index
    %c0_0 = arith.constant 0 : index
    %0 = vector.load %arg2[%c0, %c0_0] : memref<24x4xbf16, #tpu.memory_space<vmem>>, vector<24x4xbf16>
    %c0_1 = arith.constant 0 : index
    %c0_2 = arith.constant 0 : index
    %c0_3 = arith.constant 0 : index
    %1 = vector.load %arg1[%c0_1, %c0_2, %c0_3] : memref<1x4x256xbf16, #tpu.memory_space<vmem>>, vector<1x4x256xbf16>
    %2 = vector.shape_cast %1 : vector<1x4x256xbf16> to vector<4x256xbf16>
    %cst = arith.constant dense<0.000000e+00> : vector<24x256xf32>
    %3 = tpu.matmul %0, %2, %cst {dimension_numbers = #tpu.dot_dimension_numbers<[1], [0], [0], [1], [0, 0, 1, 1], [], []>} : vector<24x4xbf16>, vector<4x256xbf16>, vector<24x256xf32> -> vector<24x256xf32>
    %c0_4 = arith.constant 0 : index
    %c0_5 = arith.constant 0 : index
    %4 = vector.load %arg3[%c0_4, %c0_5] : memref<24x1xf32, #tpu.memory_space<vmem>>, vector<24x1xf32>
    %5 = vector.broadcast %4 : vector<24x1xf32> to vector<24x256xf32>
    %6 = arith.addf %3, %5 : vector<24x256xf32>
    %cst_6 = arith.constant 0.000000e+00 : f32
    %cst_7 = arith.constant 6.000000e+00 : f32
    %7 = vector.broadcast %cst_6 : f32 to vector<24x256xf32>
    %8 = arith.maximumf %7, %6 : vector<24x256xf32>
    %9 = vector.broadcast %cst_7 : f32 to vector<24x256xf32>
    %10 = arith.minimumf %9, %8 : vector<24x256xf32>
    %c0_8 = arith.constant 0 : index
    %c0_9 = arith.constant 0 : index
    %c0_10 = arith.constant 0 : index
    %11 = vector.load %arg4[%c0_8, %c0_9, %c0_10] : memref<9x24x24xbf16, #tpu.memory_space<vmem>>, vector<1x24x24xbf16>
    %12 = vector.shape_cast %11 : vector<1x24x24xbf16> to vector<24x24xbf16>
    %13 = arith.truncf %10 : vector<24x256xf32> to vector<24x256xbf16>
    %cst_11 = arith.constant dense<0.000000e+00> : vector<24x256xf32>
    %14 = tpu.matmul %12, %13, %cst_11 {dimension_numbers = #tpu.dot_dimension_numbers<[1], [0], [0], [1], [0, 0, 1, 1], [], []>} : vector<24x24xbf16>, vector<24x256xbf16>, vector<24x256xf32> -> vector<24x256xf32>
    %c255_i32 = arith.constant 255 : i32
    %15 = tpu.dynamic_rotate %10 by %c255_i32 dim 1 : vector<24x256xf32>, i32 -> vector<24x256xf32>
    %c1 = arith.constant 1 : index
    %c0_12 = arith.constant 0 : index
    %c0_13 = arith.constant 0 : index
    %16 = vector.load %arg4[%c1, %c0_12, %c0_13] : memref<9x24x24xbf16, #tpu.memory_space<vmem>>, vector<1x24x24xbf16>
    %17 = vector.shape_cast %16 : vector<1x24x24xbf16> to vector<24x24xbf16>
    %18 = arith.truncf %15 : vector<24x256xf32> to vector<24x256xbf16>
    %cst_14 = arith.constant dense<0.000000e+00> : vector<24x256xf32>
    %19 = tpu.matmul %17, %18, %cst_14 {dimension_numbers = #tpu.dot_dimension_numbers<[1], [0], [0], [1], [0, 0, 1, 1], [], []>} : vector<24x24xbf16>, vector<24x256xbf16>, vector<24x256xf32> -> vector<24x256xf32>
    %20 = arith.addf %14, %19 : vector<24x256xf32>
    %c254_i32 = arith.constant 254 : i32
    %21 = tpu.dynamic_rotate %10 by %c254_i32 dim 1 : vector<24x256xf32>, i32 -> vector<24x256xf32>
    %c2 = arith.constant 2 : index
    %c0_15 = arith.constant 0 : index
    %c0_16 = arith.constant 0 : index
    %22 = vector.load %arg4[%c2, %c0_15, %c0_16] : memref<9x24x24xbf16, #tpu.memory_space<vmem>>, vector<1x24x24xbf16>
    %23 = vector.shape_cast %22 : vector<1x24x24xbf16> to vector<24x24xbf16>
    %24 = arith.truncf %21 : vector<24x256xf32> to vector<24x256xbf16>
    %cst_17 = arith.constant dense<0.000000e+00> : vector<24x256xf32>
    %25 = tpu.matmul %23, %24, %cst_17 {dimension_numbers = #tpu.dot_dimension_numbers<[1], [0], [0], [1], [0, 0, 1, 1], [], []>} : vector<24x24xbf16>, vector<24x256xbf16>, vector<24x256xf32> -> vector<24x256xf32>
    %26 = arith.addf %20, %25 : vector<24x256xf32>
    %c240_i32 = arith.constant 240 : i32
    %27 = tpu.dynamic_rotate %10 by %c240_i32 dim 1 : vector<24x256xf32>, i32 -> vector<24x256xf32>
    %c3 = arith.constant 3 : index
    %c0_18 = arith.constant 0 : index
    %c0_19 = arith.constant 0 : index
    %28 = vector.load %arg4[%c3, %c0_18, %c0_19] : memref<9x24x24xbf16, #tpu.memory_space<vmem>>, vector<1x24x24xbf16>
    %29 = vector.shape_cast %28 : vector<1x24x24xbf16> to vector<24x24xbf16>
    %30 = arith.truncf %27 : vector<24x256xf32> to vector<24x256xbf16>
    %cst_20 = arith.constant dense<0.000000e+00> : vector<24x256xf32>
    %31 = tpu.matmul %29, %30, %cst_20 {dimension_numbers = #tpu.dot_dimension_numbers<[1], [0], [0], [1], [0, 0, 1, 1], [], []>} : vector<24x24xbf16>, vector<24x256xbf16>, vector<24x256xf32> -> vector<24x256xf32>
    %32 = arith.addf %26, %31 : vector<24x256xf32>
    %c239_i32 = arith.constant 239 : i32
    %33 = tpu.dynamic_rotate %10 by %c239_i32 dim 1 : vector<24x256xf32>, i32 -> vector<24x256xf32>
    %c4 = arith.constant 4 : index
    %c0_21 = arith.constant 0 : index
    %c0_22 = arith.constant 0 : index
    %34 = vector.load %arg4[%c4, %c0_21, %c0_22] : memref<9x24x24xbf16, #tpu.memory_space<vmem>>, vector<1x24x24xbf16>
    %35 = vector.shape_cast %34 : vector<1x24x24xbf16> to vector<24x24xbf16>
    %36 = arith.truncf %33 : vector<24x256xf32> to vector<24x256xbf16>
    %cst_23 = arith.constant dense<0.000000e+00> : vector<24x256xf32>
    %37 = tpu.matmul %35, %36, %cst_23 {dimension_numbers = #tpu.dot_dimension_numbers<[1], [0], [0], [1], [0, 0, 1, 1], [], []>} : vector<24x24xbf16>, vector<24x256xbf16>, vector<24x256xf32> -> vector<24x256xf32>
    %38 = arith.addf %32, %37 : vector<24x256xf32>
    %c238_i32 = arith.constant 238 : i32
    %39 = tpu.dynamic_rotate %10 by %c238_i32 dim 1 : vector<24x256xf32>, i32 -> vector<24x256xf32>
    %c5 = arith.constant 5 : index
    %c0_24 = arith.constant 0 : index
    %c0_25 = arith.constant 0 : index
    %40 = vector.load %arg4[%c5, %c0_24, %c0_25] : memref<9x24x24xbf16, #tpu.memory_space<vmem>>, vector<1x24x24xbf16>
    %41 = vector.shape_cast %40 : vector<1x24x24xbf16> to vector<24x24xbf16>
    %42 = arith.truncf %39 : vector<24x256xf32> to vector<24x256xbf16>
    %cst_26 = arith.constant dense<0.000000e+00> : vector<24x256xf32>
    %43 = tpu.matmul %41, %42, %cst_26 {dimension_numbers = #tpu.dot_dimension_numbers<[1], [0], [0], [1], [0, 0, 1, 1], [], []>} : vector<24x24xbf16>, vector<24x256xbf16>, vector<24x256xf32> -> vector<24x256xf32>
    %44 = arith.addf %38, %43 : vector<24x256xf32>
    %c224_i32 = arith.constant 224 : i32
    %45 = tpu.dynamic_rotate %10 by %c224_i32 dim 1 : vector<24x256xf32>, i32 -> vector<24x256xf32>
    %c6 = arith.constant 6 : index
    %c0_27 = arith.constant 0 : index
    %c0_28 = arith.constant 0 : index
    %46 = vector.load %arg4[%c6, %c0_27, %c0_28] : memref<9x24x24xbf16, #tpu.memory_space<vmem>>, vector<1x24x24xbf16>
    %47 = vector.shape_cast %46 : vector<1x24x24xbf16> to vector<24x24xbf16>
    %48 = arith.truncf %45 : vector<24x256xf32> to vector<24x256xbf16>
    %cst_29 = arith.constant dense<0.000000e+00> : vector<24x256xf32>
    %49 = tpu.matmul %47, %48, %cst_29 {dimension_numbers = #tpu.dot_dimension_numbers<[1], [0], [0], [1], [0, 0, 1, 1], [], []>} : vector<24x24xbf16>, vector<24x256xbf16>, vector<24x256xf32> -> vector<24x256xf32>
    %50 = arith.addf %44, %49 : vector<24x256xf32>
    %c223_i32 = arith.constant 223 : i32
    %51 = tpu.dynamic_rotate %10 by %c223_i32 dim 1 : vector<24x256xf32>, i32 -> vector<24x256xf32>
    %c7 = arith.constant 7 : index
    %c0_30 = arith.constant 0 : index
    %c0_31 = arith.constant 0 : index
    %52 = vector.load %arg4[%c7, %c0_30, %c0_31] : memref<9x24x24xbf16, #tpu.memory_space<vmem>>, vector<1x24x24xbf16>
    %53 = vector.shape_cast %52 : vector<1x24x24xbf16> to vector<24x24xbf16>
    %54 = arith.truncf %51 : vector<24x256xf32> to vector<24x256xbf16>
    %cst_32 = arith.constant dense<0.000000e+00> : vector<24x256xf32>
    %55 = tpu.matmul %53, %54, %cst_32 {dimension_numbers = #tpu.dot_dimension_numbers<[1], [0], [0], [1], [0, 0, 1, 1], [], []>} : vector<24x24xbf16>, vector<24x256xbf16>, vector<24x256xf32> -> vector<24x256xf32>
    %56 = arith.addf %50, %55 : vector<24x256xf32>
    %c222_i32 = arith.constant 222 : i32
    %57 = tpu.dynamic_rotate %10 by %c222_i32 dim 1 : vector<24x256xf32>, i32 -> vector<24x256xf32>
    %c8 = arith.constant 8 : index
    %c0_33 = arith.constant 0 : index
    %c0_34 = arith.constant 0 : index
    %58 = vector.load %arg4[%c8, %c0_33, %c0_34] : memref<9x24x24xbf16, #tpu.memory_space<vmem>>, vector<1x24x24xbf16>
    %59 = vector.shape_cast %58 : vector<1x24x24xbf16> to vector<24x24xbf16>
    %60 = arith.truncf %57 : vector<24x256xf32> to vector<24x256xbf16>
    %cst_35 = arith.constant dense<0.000000e+00> : vector<24x256xf32>
    %61 = tpu.matmul %59, %60, %cst_35 {dimension_numbers = #tpu.dot_dimension_numbers<[1], [0], [0], [1], [0, 0, 1, 1], [], []>} : vector<24x24xbf16>, vector<24x256xbf16>, vector<24x256xf32> -> vector<24x256xf32>
    %62 = arith.addf %56, %61 : vector<24x256xf32>
    %c0_36 = arith.constant 0 : index
    %c0_37 = arith.constant 0 : index
    %63 = vector.load %arg5[%c0_36, %c0_37] : memref<24x1xf32, #tpu.memory_space<vmem>>, vector<24x1xf32>
    %64 = vector.broadcast %63 : vector<24x1xf32> to vector<24x256xf32>
    %65 = arith.addf %62, %64 : vector<24x256xf32>
    %cst_38 = arith.constant 0.000000e+00 : f32
    %cst_39 = arith.constant 6.000000e+00 : f32
    %66 = vector.broadcast %cst_38 : f32 to vector<24x256xf32>
    %67 = arith.maximumf %66, %65 : vector<24x256xf32>
    %68 = vector.broadcast %cst_39 : f32 to vector<24x256xf32>
    %69 = arith.minimumf %68, %67 : vector<24x256xf32>
    %c0_40 = arith.constant 0 : index
    %c0_41 = arith.constant 0 : index
    %70 = vector.load %arg6[%c0_40, %c0_41] : memref<8x24xbf16, #tpu.memory_space<vmem>>, vector<8x24xbf16>
    %71 = arith.truncf %69 : vector<24x256xf32> to vector<24x256xbf16>
    %cst_42 = arith.constant dense<0.000000e+00> : vector<8x256xf32>
    %72 = tpu.matmul %70, %71, %cst_42 {dimension_numbers = #tpu.dot_dimension_numbers<[1], [0], [0], [1], [0, 0, 1, 1], [], []>} : vector<8x24xbf16>, vector<24x256xbf16>, vector<8x256xf32> -> vector<8x256xf32>
    %c0_43 = arith.constant 0 : index
    %c0_44 = arith.constant 0 : index
    %73 = vector.load %arg7[%c0_43, %c0_44] : memref<8x1xf32, #tpu.memory_space<vmem>>, vector<8x1xf32>
    %74 = vector.broadcast %73 : vector<8x1xf32> to vector<8x256xf32>
    %75 = arith.addf %72, %74 : vector<8x256xf32>
    %cst_45 = arith.constant 0.000000e+00 : f32
    %cst_46 = arith.constant 6.000000e+00 : f32
    %76 = vector.broadcast %cst_45 : f32 to vector<8x256xf32>
    %77 = arith.maximumf %76, %75 : vector<8x256xf32>
    %78 = vector.broadcast %cst_46 : f32 to vector<8x256xf32>
    %79 = arith.minimumf %78, %77 : vector<8x256xf32>
    %c0_47 = arith.constant 0 : index
    %c0_48 = arith.constant 0 : index
    %c0_49 = arith.constant 0 : index
    %80 = vector.load %arg8[%c0_47, %c0_48, %c0_49] : memref<1x8x256xf32, #tpu.memory_space<vmem>>, vector<1x8x256xf32>
    %81 = vector.shape_cast %80 : vector<1x8x256xf32> to vector<8x256xf32>
    %82 = vector.shape_cast %79 : vector<8x256xf32> to vector<1x8x256xf32>
    tpu.vector_store %arg8[%c0_47, %c0_48, %c0_49], %82 {strides = array<i32>} : memref<1x8x256xf32, #tpu.memory_space<vmem>>, vector<1x8x256xf32>,
    return
  }
  func.func @transform_0(%arg0: i32) -> (i32, i32, i32) {
    %c0_i32 = arith.constant 0 : i32
    %c0_i32_0 = arith.constant 0 : i32
    %c0_i32_1 = arith.constant 0 : i32
    return %arg0, %c0_i32, %c0_i32_0 : i32, i32, i32
  }
  func.func @transform_1(%arg0: i32) -> (i32, i32) {
    %c0_i32 = arith.constant 0 : i32
    %c0_i32_0 = arith.constant 0 : i32
    %c0_i32_1 = arith.constant 0 : i32
    return %c0_i32, %c0_i32_0 : i32, i32
  }
  func.func @transform_2(%arg0: i32) -> (i32, i32) {
    %c0_i32 = arith.constant 0 : i32
    %c0_i32_0 = arith.constant 0 : i32
    %c0_i32_1 = arith.constant 0 : i32
    return %c0_i32, %c0_i32_0 : i32, i32
  }
  func.func @transform_3(%arg0: i32) -> (i32, i32, i32) {
    %c0_i32 = arith.constant 0 : i32
    %c0_i32_0 = arith.constant 0 : i32
    %c0_i32_1 = arith.constant 0 : i32
    %c0_i32_2 = arith.constant 0 : i32
    return %c0_i32, %c0_i32_0, %c0_i32_1 : i32, i32, i32
  }
  func.func @transform_4(%arg0: i32) -> (i32, i32) {
    %c0_i32 = arith.constant 0 : i32
    %c0_i32_0 = arith.constant 0 : i32
    %c0_i32_1 = arith.constant 0 : i32
    return %c0_i32, %c0_i32_0 : i32, i32
  }
  func.func @transform_5(%arg0: i32) -> (i32, i32) {
    %c0_i32 = arith.constant 0 : i32
    %c0_i32_0 = arith.constant 0 : i32
    %c0_i32_1 = arith.constant 0 : i32
    return %c0_i32, %c0_i32_0 : i32, i32
  }
  func.func @transform_6(%arg0: i32) -> (i32, i32) {
    %c0_i32 = arith.constant 0 : i32
    %c0_i32_0 = arith.constant 0 : i32
    %c0_i32_1 = arith.constant 0 : i32
    return %c0_i32, %c0_i32_0 : i32, i32
  }
  func.func @transform_7(%arg0: i32) -> (i32, i32, i32) {
    %c0_i32 = arith.constant 0 : i32
    %c0_i32_0 = arith.constant 0 : i32
    %c0_i32_1 = arith.constant 0 : i32
    return %arg0, %c0_i32, %c0_i32_0 : i32, i32, i32
  }
}

</mosaic_0001>

<llo_original>
// kernel: inverted_residual_forward.1
$region0: #{inverted_residual_forward.1}
  #allocation0 [shape = 'u32[]', space=smem, size = 0x4, offset = 0x4, fixed_abs, tag = 'smem constant byte address 0x4 - core index']
  #allocation1 [shape = 'u32[144,128]{1,0:T(1,128)}', space=vmem, size = 0x12000, scoped, tag = 'internal scratch']
  %s0 = inlined_call_operand.vmem [shape: bf16[2,4,256], index: 0, kind: input, shape index: {}]
  %s1 = inlined_call_operand.vmem [shape: bf16[24,4], index: 1, kind: input, shape index: {}]
  %s2 = inlined_call_operand.vmem [shape: f32[24,1], index: 2, kind: input, shape index: {}]
  %s3 = inlined_call_operand.vmem [shape: bf16[9,24,24], index: 3, kind: input, shape index: {}]
  %s4 = inlined_call_operand.vmem [shape: f32[24,1], index: 4, kind: input, shape index: {}]
  %s5 = inlined_call_operand.vmem [shape: bf16[8,24], index: 5, kind: input, shape index: {}]
  %s6 = inlined_call_operand.vmem [shape: f32[8,1], index: 6, kind: input, shape index: {}]
  %s7 = inlined_call_operand.vmem [shape: f32[2,8,256], index: 7, kind: output, shape index: {}]
  %s8 = sld [smem:[#allocation0]]
  $region61: #{inverted_residual_forward.1} parent=0
    _
  %s10 = ssub.s32 1, %s8
  %s11 = scalar_select 0, %s10, %s8
  loop: start=0, step=1, limit=4
  $region2: #{inverted_residual_forward.1} parent=0 // loop_pre_header
    _
  $region3: #{inverted_residual_forward.1} parent=0 // loop_header
    %s13 = sphi 0, %s17
    %p14 = scmp.ge.s32.totalorder %s13, 4
    %s23 = sphi 0, %s25
    %s26 = sphi 0, %s23
    %s27 = sphi 0, %s26
    %s43 = sphi 0, %s27
    %s47 = sphi 0, %s47
    %s49 = sphi 0, %s47
    %s50 = sphi 0, %s49
    %s64 = sphi 0, %s50
    %s68 = sphi 0, %s68
    %s70 = sphi 0, %s68
    %s71 = sphi 0, %s70
    %s85 = sphi 0, %s71
    %s89 = sphi 0, %s89
    %s91 = sphi 0, %s89
    %s92 = sphi 0, %s91
    %s106 = sphi 0, %s92
    %s110 = sphi 0, %s110
    %s112 = sphi 0, %s110
    %s113 = sphi 0, %s112
    %s127 = sphi 0, %s113
    %s131 = sphi 0, %s131
    %s133 = sphi 0, %s131
    %s134 = sphi 0, %s133
    %s148 = sphi 0, %s134
    %s152 = sphi 0, %s152
    %s154 = sphi 0, %s152
    %s155 = sphi 0, %s154
    %s169 = sphi 0, %s155
    %s175 = sphi 0, %s177
    %s178 = sphi 0, %s175
    %s179 = sphi 0, %s178
    %s195 = sphi 0, %s179
  $region4: #{inverted_residual_forward.1} parent=0 // loop_header_branch
    %16 = sbr.rel (%p14) target = $region8
  $region5: #{inverted_residual_forward.1} parent=0 // loop_body
    %s18 = ssub.s32 %s13, 1
    %s19 = ssub.s32 %s13, 2
    %s20 = sadd.s32 %s13, 1
    %s21 = ssub.s32 %s13, %s20
    %p22 = scmp.eq.s32.totalorder %s21, 0
    %s24 = sadd.s32 %s23, 1
    %s25 = scalar_select %p22, %s23, %s24
    %p28 = pneg %p22
    %p29 = scmp.eq.s32.totalorder %s13, 1
    %p30 = por %p28, %p29
    %p31 = scmp.ne.s32.totalorder %s23, %s26
    %p32 = scmp.eq.s32.totalorder %s13, 0
    %p33 = por %p31, %p32
    %p34 = scmp.ne.s32.totalorder %s23, %s26
    %p35 = scmp.eq.s32.totalorder %s18, 1
    %p36 = por %p34, %p35
    %p37 = scmp.ne.s32.totalorder %s26, %s27
    %p38 = scmp.eq.s32.totalorder %s18, 0
    %p39 = por %p37, %p38
    %p40 = scmp.ne.s32.totalorder %s26, %s27
    %p41 = scmp.eq.s32.totalorder %s19, 1
    %p42 = por %p40, %p41
    %p44 = scmp.ne.s32.totalorder %s27, %s43
    %p45 = scmp.eq.s32.totalorder %s19, 0
    %p46 = por %p44, %p45
    %s48 = sadd.s32 %s47, 1
    %p51 = scmp.eq.s32.totalorder %s13, 1
    %p52 = scmp.ne.s32.totalorder %s47, %s49
    %p53 = scmp.eq.s32.totalorder %s13, 0
    %p54 = por %p52, %p53
    %p55 = scmp.ne.s32.totalorder %s47, %s49
    %p56 = scmp.eq.s32.totalorder %s18, 1
    %p57 = por %p55, %p56
    %p58 = scmp.ne.s32.totalorder %s49, %s50
    %p59 = scmp.eq.s32.totalorder %s18, 0
    %p60 = por %p58, %p59
    %p61 = scmp.ne.s32.totalorder %s49, %s50
    %p62 = scmp.eq.s32.totalorder %s19, 1
    %p63 = por %p61, %p62
    %p65 = scmp.ne.s32.totalorder %s50, %s64
    %p66 = scmp.eq.s32.totalorder %s19, 0
    %p67 = por %p65, %p66
    %s69 = sadd.s32 %s68, 1
    %p72 = scmp.eq.s32.totalorder %s13, 1
    %p73 = scmp.ne.s32.totalorder %s68, %s70
    %p74 = scmp.eq.s32.totalorder %s13, 0
    %p75 = por %p73, %p74
    %p76 = scmp.ne.s32.totalorder %s68, %s70
    %p77 = scmp.eq.s32.totalorder %s18, 1
    %p78 = por %p76, %p77
    %p79 = scmp.ne.s32.totalorder %s70, %s71
    %p80 = scmp.eq.s32.totalorder %s18, 0
    %p81 = por %p79, %p80
    %p82 = scmp.ne.s32.totalorder %s70, %s71
    %p83 = scmp.eq.s32.totalorder %s19, 1
    %p84 = por %p82, %p83
    %p86 = scmp.ne.s32.totalorder %s71, %s85
    %p87 = scmp.eq.s32.totalorder %s19, 0
    %p88 = por %p86, %p87
    %s90 = sadd.s32 %s89, 1
    %p93 = scmp.eq.s32.totalorder %s13, 1
    %p94 = scmp.ne.s32.totalorder %s89, %s91
    %p95 = scmp.eq.s32.totalorder %s13, 0
    %p96 = por %p94, %p95
    %p97 = scmp.ne.s32.totalorder %s89, %s91
    %p98 = scmp.eq.s32.totalorder %s18, 1
    %p99 = por %p97, %p98
    %p100 = scmp.ne.s32.totalorder %s91, %s92
    %p101 = scmp.eq.s32.totalorder %s18, 0
    %p102 = por %p100, %p101
    %p103 = scmp.ne.s32.totalorder %s91, %s92
    %p104 = scmp.eq.s32.totalorder %s19, 1
    %p105 = por %p103, %p104
    %p107 = scmp.ne.s32.totalorder %s92, %s106
    %p108 = scmp.eq.s32.totalorder %s19, 0
    %p109 = por %p107, %p108
    %s111 = sadd.s32 %s110, 1
    %p114 = scmp.eq.s32.totalorder %s13, 1
    %p115 = scmp.ne.s32.totalorder %s110, %s112
    %p116 = scmp.eq.s32.totalorder %s13, 0
    %p117 = por %p115, %p116
    %p118 = scmp.ne.s32.totalorder %s110, %s112
    %p119 = scmp.eq.s32.totalorder %s18, 1
    %p120 = por %p118, %p119
    %p121 = scmp.ne.s32.totalorder %s112, %s113
    %p122 = scmp.eq.s32.totalorder %s18, 0
    %p123 = por %p121, %p122
    %p124 = scmp.ne.s32.totalorder %s112, %s113
    %p125 = scmp.eq.s32.totalorder %s19, 1
    %p126 = por %p124, %p125
    %p128 = scmp.ne.s32.totalorder %s113, %s127
    %p129 = scmp.eq.s32.totalorder %s19, 0
    %p130 = por %p128, %p129
    %s132 = sadd.s32 %s131, 1
    %p135 = scmp.eq.s32.totalorder %s13, 1
    %p136 = scmp.ne.s32.totalorder %s131, %s133
    %p137 = scmp.eq.s32.totalorder %s13, 0
    %p138 = por %p136, %p137
    %p139 = scmp.ne.s32.totalorder %s131, %s133
    %p140 = scmp.eq.s32.totalorder %s18, 1
    %p141 = por %p139, %p140
    %p142 = scmp.ne.s32.totalorder %s133, %s134
    %p143 = scmp.eq.s32.totalorder %s18, 0
    %p144 = por %p142, %p143
    %p145 = scmp.ne.s32.totalorder %s133, %s134
    %p146 = scmp.eq.s32.totalorder %s19, 1
    %p147 = por %p145, %p146
    %p149 = scmp.ne.s32.totalorder %s134, %s148
    %p150 = scmp.eq.s32.totalorder %s19, 0
    %p151 = por %p149, %p150
    %s153 = sadd.s32 %s152, 1
    %p156 = scmp.eq.s32.totalorder %s13, 1
    %p157 = scmp.ne.s32.totalorder %s152, %s154
    %p158 = scmp.eq.s32.totalorder %s13, 0
    %p159 = por %p157, %p158
    %p160 = scmp.ne.s32.totalorder %s152, %s154
    %p161 = scmp.eq.s32.totalorder %s18, 1
    %p162 = por %p160, %p161
    %p163 = scmp.ne.s32.totalorder %s154, %s155
    %p164 = scmp.eq.s32.totalorder %s18, 0
    %p165 = por %p163, %p164
    %p166 = scmp.ne.s32.totalorder %s154, %s155
    %p167 = scmp.eq.s32.totalorder %s19, 1
    %p168 = por %p166, %p167
    %p170 = scmp.ne.s32.totalorder %s155, %s169
    %p171 = scmp.eq.s32.totalorder %s19, 0
    %p172 = por %p170, %p171
    %s173 = ssub.s32 %s13, %s20
    %p174 = scmp.eq.s32.totalorder %s173, 0
    %s176 = sadd.s32 %s175, 1
    %s177 = scalar_select %p174, %s175, %s176
    %p180 = pneg %p174
    %p181 = scmp.eq.s32.totalorder %s13, 1
    %p182 = por %p180, %p181
    %p183 = scmp.ne.s32.totalorder %s175, %s178
    %p184 = scmp.eq.s32.totalorder %s13, 0
    %p185 = por %p183, %p184
    %p186 = scmp.ne.s32.totalorder %s175, %s178
    %p187 = scmp.eq.s32.totalorder %s18, 1
    %p188 = por %p186, %p187
    %p189 = scmp.ne.s32.totalorder %s178, %s179
    %p190 = scmp.eq.s32.totalorder %s18, 0
    %p191 = por %p189, %p190
    %p192 = scmp.ne.s32.totalorder %s178, %s179
    %p193 = scmp.eq.s32.totalorder %s19, 1
    %p194 = por %p192, %p193
    %p196 = scmp.ne.s32.totalorder %s179, %s195
    %p197 = scmp.eq.s32.totalorder %s19, 0
    %p198 = por %p196, %p197
    %p199 = scmp.le.s32.totalorder 1, %s13
    %p200 = scmp.lt.s32.totalorder %s13, 3
    %p201 = pnand %p199, %p200
    %p202 = pneg %p201
    // Predicated region
    $region9: #{inverted_residual_forward.1} parent=5 // pred_check
      _
    $region10: #{inverted_residual_forward.1} parent=5 // pred_check_branch
      %204 = sbr.rel (%p201) target = $region12
    $region11: #{inverted_residual_forward.1} parent=5 // pred_region
      %s205 = ssub.s32 %s13, 1
      // Predicated region
      $region13: #{inverted_residual_forward.1} parent=11 // pred_check
        %p206 = pneg %p60
      $region14: #{inverted_residual_forward.1} parent=11 // pred_check_branch
        %208 = sbr.rel (%p206) target = $region16
      $region15: #{inverted_residual_forward.1} parent=11 // pred_region
        _
      $region16: #{inverted_residual_forward.1} parent=11 // pred_fallthru
        _
      // Predicated region
      $region17: #{inverted_residual_forward.1} parent=11 // pred_check
        %p209 = pneg %p81
      $region18: #{inverted_residual_forward.1} parent=11 // pred_check_branch
        %211 = sbr.rel (%p209) target = $region20
      $region19: #{inverted_residual_forward.1} parent=11 // pred_region
        _
      $region20: #{inverted_residual_forward.1} parent=11 // pred_fallthru
        _
      // Predicated region
      $region21: #{inverted_residual_forward.1} parent=11 // pred_check
        %p212 = pneg %p102
      $region22: #{inverted_residual_forward.1} parent=11 // pred_check_branch
        %214 = sbr.rel (%p212) target = $region24
      $region23: #{inverted_residual_forward.1} parent=11 // pred_region
        _
      $region24: #{inverted_residual_forward.1} parent=11 // pred_fallthru
        _
      // Predicated region
      $region25: #{inverted_residual_forward.1} parent=11 // pred_check
        %p215 = pneg %p123
      $region26: #{inverted_residual_forward.1} parent=11 // pred_check_branch
        %217 = sbr.rel (%p215) target = $region28
      $region27: #{inverted_residual_forward.1} parent=11 // pred_region
        _
      $region28: #{inverted_residual_forward.1} parent=11 // pred_fallthru
        _
      // Predicated region
      $region29: #{inverted_residual_forward.1} parent=11 // pred_check
        %p218 = pneg %p144
      $region30: #{inverted_residual_forward.1} parent=11 // pred_check_branch
        %220 = sbr.rel (%p218) target = $region32
      $region31: #{inverted_residual_forward.1} parent=11 // pred_region
        _
      $region32: #{inverted_residual_forward.1} parent=11 // pred_fallthru
        _
      // Predicated region
      $region33: #{inverted_residual_forward.1} parent=11 // pred_check
        %p221 = pneg %p165
      $region34: #{inverted_residual_forward.1} parent=11 // pred_check_branch
        %223 = sbr.rel (%p221) target = $region36
      $region35: #{inverted_residual_forward.1} parent=11 // pred_region
        _
      $region36: #{inverted_residual_forward.1} parent=11 // pred_fallthru
        _
    $region12: #{inverted_residual_forward.1} parent=5 // pred_fallthru
      _
    %p224 = scmp.lt.s32.totalorder %s13, 2
    // Predicated region
    $region37: #{inverted_residual_forward.1} parent=5 // pred_check
      %p225 = pneg %p224
    $region38: #{inverted_residual_forward.1} parent=5 // pred_check_branch
      %227 = sbr.rel (%p225) target = $region40
    $region39: #{inverted_residual_forward.1} parent=5 // pred_region
      // Predicated region
      $region41: #{inverted_residual_forward.1} parent=39 // pred_check
        %p228 = pneg %p33
      $region42: #{inverted_residual_forward.1} parent=39 // pred_check_branch
        %230 = sbr.rel (%p228) target = $region44
      $region43: #{inverted_residual_forward.1} parent=39 // pred_region
        %p231 = scmp.lt.s32.totalorder %s13, 1
        %s232 = scalar_select %p231, %s13, 1
        %s233 = smul.addr %s232, 2
        %s234 = smul.addr %s233, 2
        %s235 = scalar_lea.vmem %s0, %s234
      $region44: #{inverted_residual_forward.1} parent=39 // pred_fallthru
        _
    $region40: #{inverted_residual_forward.1} parent=5 // pred_fallthru
      _
    %p236 = scmp.le.s32.totalorder 1, %s13
    %p237 = scmp.lt.s32.totalorder %s13, 3
    %p238 = pnand %p236, %p237
    %p239 = pneg %p238
    // Predicated region
    $region45: #{inverted_residual_forward.1} parent=5 // pred_check
      _
    $region46: #{inverted_residual_forward.1} parent=5 // pred_check_branch
      %241 = sbr.rel (%p238) target = $region48
    $region47: #{inverted_residual_forward.1} parent=5 // pred_region
      %s242 = ssub.s32 %s13, 1
      %p243 = scmp.lt.s32.totalorder %s18, 1
      %s244 = scalar_select %p243, %s18, 1
      %s245 = smul.addr %s244, 2
      %s246 = smul.addr %s245, 2
      %s247 = scalar_lea.vmem %s0, %s246
      %p248 = pneg %p39
      %p249 = pneg %p36
      %p250 = pneg %p60
      %p251 = pneg %p57
      %p252 = pneg %p81
      %p253 = pneg %p78
      %p254 = pneg %p102
      %p255 = pneg %p99
      %p256 = pneg %p123
      %p257 = pneg %p120
      %p258 = pneg %p144
      %p259 = pneg %p141
      %p260 = pneg %p165
      %p261 = pneg %p162
      %p262 = pneg %p191
      %p263 = pneg %p188
      %p264 = scmp.lt.s32.totalorder %s18, 1
      %s265 = scalar_select %p264, %s18, 1
      %s266 = smul.addr %s265, 2
      %s267 = smul.addr %s266, 8
      %s268 = scalar_lea.vmem %s7, %s267
      %p269 = scmp.lt.s32.totalorder %s18, 1
      %s270 = scalar_select %p269, %s18, 1
      %s271 = smul.addr %s270, 2
      %s272 = smul.addr %s271, 2
      %s273 = scalar_lea.vmem %s0, %s272
      %p274 = scmp.lt.s32.totalorder %s18, 1
      %s275 = scalar_select %p274, %s18, 1
      %s276 = smul.addr %s275, 2
      %s277 = smul.addr %s276, 8
      %s278 = scalar_lea.vmem %s7, %s277
      %v280 = vld [vmem:[%s1] sm:$0xf]
      %v281 = vld [vmem:[%s1 + $0x4] sm:$0xf]
      %v282 = vld [vmem:[%s1 + $0x8] sm:$0xf]
      %v283 = vld [vmem:[%s273] sm:$0xf]
      %v284 = vld [vmem:[%s2] sm:$0xff]
      %v285 = vld [vmem:[%s2 + $0x8] sm:$0xff]
      %v286 = vld [vmem:[%s2 + $0x10] sm:$0xff]
      %288 = vset.pattern.permute.xlu0 0
      %289 = vperm.xlu0 %288, %v284
      %v290 = vpop.permute.xlu0 %289
      %293 = vset.pattern.permute.xlu0 0
      %294 = vperm.xlu0 %293, %v285
      %v295 = vpop.permute.xlu0 %294
      %298 = vset.pattern.permute.xlu0 0
      %299 = vperm.xlu0 %298, %v286
      %v300 = vpop.permute.xlu0 %299
      %v305 = vunpack.c.l.b16 %v280
      %v306 = vunpack.c.l.b16 %v281
      %v307 = vunpack.c.l.b16 %v282
      %v308 = vpack.c.b16 %v306, %v305
      %v309 = vpack.c.b16 %v307, %v307
      %v312 = vunpack.c.l.s4 1983009808
      %v313 = vunpack.c.0.s8 %v312
      %v314 = vlaneseq
      %v315 = vshrl.u32 %v314, 7
      %v316 = vsub.s32 %v313, %v315
      %v317 = vrot.slane %v283, %v316
      %v318 = vcombine.high %v317, %v317
      %vm319 = vcmask 31744
      %v321 = vsel %vm319, %v308, 0
      %v324 = vsel %vm319, %v309, 0
      %vm326 = vcmask 1041408
      %v328 = vsel %vm326, %v317, 0
      %v331 = vsel %vm326, %v318, 0
      %333 = vmatprep.subr.bf16.mxu0 %v331
      %334 = vmatpush1.bf16.msra.mxu0 %v328
      %335 = vmatprep.subr.bf16.mxu0 0
      %336 = vmatpush1.bf16.msra.mxu0 0
      %337 = vmatprep.subr.bf16.mxu0 0
      %338 = vmatpush1.bf16.msra.mxu0 0
      %339 = vmatprep.subr.bf16.mxu0 0
      %340 = vmatpush1.bf16.msra.mxu0 0
      %341 = vmatprep.subr.bf16.mxu0 0
      %342 = vmatpush1.bf16.msra.mxu0 0
      %343 = vmatprep.subr.bf16.mxu0 0
      %344 = vmatpush1.bf16.msra.mxu0 0
      %345 = vmatprep.subr.bf16.mxu0 0
      %346 = vmatpush1.bf16.msra.mxu0 0
      %347 = vmatprep.subr.bf16.mxu0 0
      %348 = vmatpush1.bf16.msra.mxu0 0
      %349 = vmatprep.subr.bf16.mxu0 0
      %350 = vmatpush1.bf16.msra.mxu0 0
      %351 = vmatprep.subr.bf16.mxu0 0
      %352 = vmatpush1.bf16.msra.mxu0 0
      %353 = vmatprep.subr.bf16.mxu0 0
      %354 = vmatpush1.bf16.msra.mxu0 0
      %355 = vmatprep.subr.bf16.mxu0 0
      %356 = vmatpush1.bf16.msra.mxu0 0
      %357 = vmatprep.subr.bf16.mxu0 0
      %358 = vmatpush1.bf16.msra.mxu0 0
      %359 = vmatprep.subr.bf16.mxu0 0
      %360 = vmatpush1.bf16.msra.mxu0 0
      %361 = vmatprep.subr.bf16.mxu0 0
      %362 = vmatpush1.bf16.msra.mxu0 0
      %363 = vmatprep.subr.bf16.mxu0 0
      %364 = vmatpush1.bf16.msra.mxu0 0
      %365 = vmatprep.mubr.bf16.mxu0 0
      %366 = vmatmul.mubr.bf16.gmra.mrb[0].mxu0 %v321
      %v367 = vpop.f32.mrb[0].mxu0
      %v368 = vadd.f32 %v290, %v367
      %v369 = vpop.f32.mrb[0].mxu0
      %v370 = vadd.f32 %v290, %v369
      %v371 = vpop.f32.mrb[0].mxu0
      %v372 = vadd.f32 %v295, %v371
      %v373 = vpop.f32.mrb[0].mxu0
      %v374 = vadd.f32 %v295, %v373
      %375 = vmatprep.mubr.bf16.mxu0 0
      %376 = vmatmul.mubr.bf16.gmra.mrb[0].mxu0 %v324
      %v377 = vpop.f32.mrb[0].mxu0
      %v378 = vadd.f32 %v300, %v377
      %v379 = vpop.f32.mrb[0].mxu0
      %v380 = vadd.f32 %v300, %v379
      %v381 = vpop.f32.mrb[0].mxu0
      %v382 = vpop.f32.mrb[0].mxu0
      %383 = vdwg.mxu0
      %v384 = vmax.f32 %v368, 0.0
      %v385 = vmax.f32 %v370, 0.0
      %v386 = vmax.f32 %v372, 0.0
      %v387 = vmax.f32 %v374, 0.0
      %v388 = vmax.f32 %v378, 0.0
      %v389 = vmax.f32 %v380, 0.0
      %v390 = vmin.f32 %v384, 6.0
      %v391 = vmin.f32 %v385, 6.0
      %v392 = vmin.f32 %v386, 6.0
      %v393 = vmin.f32 %v387, 6.0
      %v394 = vmin.f32 %v388, 6.0
      %v395 = vmin.f32 %v389, 6.0
      %v396 = vld [vmem:[%s3] sm:$0xf]
      %v397 = vld [vmem:[%s3 + $0x4] sm:$0xf]
      %v398 = vld [vmem:[%s3 + $0x8] sm:$0xf]
      %v399 = vpack.c.bf16 %v392, %v390
      %v400 = vpack.c.bf16 %v393, %v391
      %v401 = vpack.c.bf16 %v394, %v394
      %v402 = vpack.c.bf16 %v395, %v395
      %403 = vrot.lane.b32.xlu0 %v390, 127
      %v404 = vpop.permute.xlu0 %403
      %405 = vrot.lane.b32.xlu0 %v392, 127
      %v406 = vpop.permute.xlu0 %405
      %407 = vrot.lane.b32.xlu0 %v394, 127
      %v408 = vpop.permute.xlu0 %407
      %409 = vrot.lane.b32.xlu0 %v391, 127
      %v410 = vpop.permute.xlu0 %409
      %411 = vrot.lane.b32.xlu0 %v393, 127
      %v412 = vpop.permute.xlu0 %411
      %413 = vrot.lane.b32.xlu0 %v395, 127
      %v414 = vpop.permute.xlu0 %413
      %v415 = vlaneseq
      %v416 = vand.u32 %v415, 127
      %vm417 = vcmp.lt.s32.totalorder %v416, 127
      %v418 = vsel %vm417, %v404, %v410
      %v419 = vsel %vm417, %v406, %v412
      %v420 = vsel %vm417, %v408, %v414
      %v421 = vsel %vm417, %v410, %v404
      %v422 = vsel %vm417, %v412, %v406
      %v423 = vsel %vm417, %v414, %v408
      %s424 = scalar_lea.vmem %s3, 12
      %v425 = vld [vmem:[%s424] sm:$0xf]
      %v426 = vld [vmem:[%s424 + $0x4] sm:$0xf]
      %v427 = vld [vmem:[%s424 + $0x8] sm:$0xf]
      %v428 = vpack.c.bf16 %v419, %v418
      %v429 = vpack.c.bf16 %v422, %v421
      %v430 = vpack.c.bf16 %v420, %v420
      %v431 = vpack.c.bf16 %v423, %v423
      %v435 = vunpack.c.l.b16 %v425
      %v436 = vunpack.c.l.b16 %v426
      %v437 = vunpack.c.l.b16 %v427
      %v438 = vpack.c.b16 %v436, %v435
      %v439 = vpack.c.b16 %v437, %v437
      %vm440 = vcmask 195584
      %v442 = vsel %vm440, %v438, 0
      %v445 = vsel %vm440, %v439, 0
      %vm447 = vcmask 1043456
      %v449 = vsel %vm447, %v430, 0
      %v452 = vsel %vm447, %v431, 0
      %454 = vmatprep.subr.bf16.mxu0 %v429
      %455 = vmatpush1.bf16.msra.mxu0 %v428
      %456 = vmatprep.subr.bf16.mxu0 %v452
      %457 = vmatpush1.bf16.msra.mxu0 %v449
      %458 = vmatprep.subr.bf16.mxu0 0
      %459 = vmatpush1.bf16.msra.mxu0 0
      %460 = vmatprep.subr.bf16.mxu0 0
      %461 = vmatpush1.bf16.msra.mxu0 0
      %462 = vmatprep.subr.bf16.mxu0 0
      %463 = vmatpush1.bf16.msra.mxu0 0
      %464 = vmatprep.subr.bf16.mxu0 0
      %465 = vmatpush1.bf16.msra.mxu0 0
      %466 = vmatprep.subr.bf16.mxu0 0
      %467 = vmatpush1.bf16.msra.mxu0 0
      %468 = vmatprep.subr.bf16.mxu0 0
      %469 = vmatpush1.bf16.msra.mxu0 0
      %470 = vmatprep.subr.bf16.mxu0 0
      %471 = vmatpush1.bf16.msra.mxu0 0
      %472 = vmatprep.subr.bf16.mxu0 0
      %473 = vmatpush1.bf16.msra.mxu0 0
      %474 = vmatprep.subr.bf16.mxu0 0
      %475 = vmatpush1.bf16.msra.mxu0 0
      %476 = vmatprep.subr.bf16.mxu0 0
      %477 = vmatpush1.bf16.msra.mxu0 0
      %478 = vmatprep.subr.bf16.mxu0 0
      %479 = vmatpush1.bf16.msra.mxu0 0
      %480 = vmatprep.subr.bf16.mxu0 0
      %481 = vmatpush1.bf16.msra.mxu0 0
      %482 = vmatprep.subr.bf16.mxu0 0
      %483 = vmatpush1.bf16.msra.mxu0 0
      %484 = vmatprep.subr.bf16.mxu0 0
      %485 = vmatpush1.bf16.msra.mxu0 0
      %486 = vmatprep.mubr.bf16.mxu0 0
      %487 = vmatmul.mubr.bf16.gmra.mrb[0].mxu0 %v442
      %v488 = vpop.f32.mrb[0].mxu0
      %v489 = vadd.f32 0.0, %v488
      %v490 = vpop.f32.mrb[0].mxu0
      %v491 = vadd.f32 0.0, %v490
      %v492 = vpop.f32.mrb[0].mxu0
      %v493 = vadd.f32 0.0, %v492
      %v494 = vpop.f32.mrb[0].mxu0
      %v495 = vadd.f32 0.0, %v494
      %496 = vmatprep.mubr.bf16.mxu0 0
      %497 = vmatmul.mubr.bf16.gmra.mrb[0].mxu0 %v445
      %v498 = vpop.f32.mrb[0].mxu0
      %v499 = vadd.f32 0.0, %v498
      %v500 = vpop.f32.mrb[0].mxu0
      %v501 = vadd.f32 0.0, %v500
      %v502 = vpop.f32.mrb[0].mxu0
      %v503 = vpop.f32.mrb[0].mxu0
      %504 = vdwg.mxu0
      %v508 = vunpack.c.l.b16 %v396
      %v509 = vunpack.c.l.b16 %v397
      %v510 = vunpack.c.l.b16 %v398
      %v511 = vpack.c.b16 %v509, %v508
      %v512 = vpack.c.b16 %v510, %v510
      %v514 = vsel %vm440, %v511, 0
      %v517 = vsel %vm440, %v512, 0
      %v520 = vsel %vm447, %v401, 0
      %v523 = vsel %vm447, %v402, 0
      %525 = vmatprep.subr.bf16.mxu0 %v400
      %526 = vmatpush1.bf16.msra.mxu0 %v399
      %527 = vmatprep.subr.bf16.mxu0 %v523
      %528 = vmatpush1.bf16.msra.mxu0 %v520
      %529 = vmatprep.subr.bf16.mxu0 0
      %530 = vmatpush1.bf16.msra.mxu0 0
      %531 = vmatprep.subr.bf16.mxu0 0
      %532 = vmatpush1.bf16.msra.mxu0 0
      %533 = vmatprep.subr.bf16.mxu0 0
      %534 = vmatpush1.bf16.msra.mxu0 0
      %535 = vmatprep.subr.bf16.mxu0 0
      %536 = vmatpush1.bf16.msra.mxu0 0
      %537 = vmatprep.subr.bf16.mxu0 0
      %538 = vmatpush1.bf16.msra.mxu0 0
      %539 = vmatprep.subr.bf16.mxu0 0
      %540 = vmatpush1.bf16.msra.mxu0 0
      %541 = vmatprep.subr.bf16.mxu0 0
      %542 = vmatpush1.bf16.msra.mxu0 0
      %543 = vmatprep.subr.bf16.mxu0 0
      %544 = vmatpush1.bf16.msra.mxu0 0
      %545 = vmatprep.subr.bf16.mxu0 0
      %546 = vmatpush1.bf16.msra.mxu0 0
      %547 = vmatprep.subr.bf16.mxu0 0
      %548 = vmatpush1.bf16.msra.mxu0 0
      %549 = vmatprep.subr.bf16.mxu0 0
      %550 = vmatpush1.bf16.msra.mxu0 0
      %551 = vmatprep.subr.bf16.mxu0 0
      %552 = vmatpush1.bf16.msra.mxu0 0
      %553 = vmatprep.subr.bf16.mxu0 0
      %554 = vmatpush1.bf16.msra.mxu0 0
      %555 = vmatprep.subr.bf16.mxu0 0
      %556 = vmatpush1.bf16.msra.mxu0 0
      %557 = vmatprep.mubr.bf16.mxu0 0
      %558 = vmatmul.mubr.bf16.gmra.mrb[0].mxu0 %v514
      %v559 = vpop.f32.mrb[0].mxu0
      %v560 = vadd.f32 %v489, %v559
      %v561 = vpop.f32.mrb[0].mxu0
      %v562 = vadd.f32 %v491, %v561
      %v563 = vpop.f32.mrb[0].mxu0
      %v564 = vadd.f32 %v493, %v563
      %v565 = vpop.f32.mrb[0].mxu0
      %v566 = vadd.f32 %v495, %v565
      %567 = vmatprep.mubr.bf16.mxu0 0
      %568 = vmatmul.mubr.bf16.gmra.mrb[0].mxu0 %v517
      %v569 = vpop.f32.mrb[0].mxu0
      %v570 = vadd.f32 %v499, %v569
      %v571 = vpop.f32.mrb[0].mxu0
      %v572 = vadd.f32 %v501, %v571
      %v573 = vpop.f32.mrb[0].mxu0
      %v574 = vpop.f32.mrb[0].mxu0
      %575 = vdwg.mxu0
      %576 = vrot.lane.b32.xlu0 %v390, 126
      %v577 = vpop.permute.xlu0 %576
      %578 = vrot.lane.b32.xlu0 %v392, 126
      %v579 = vpop.permute.xlu0 %578
      %580 = vrot.lane.b32.xlu0 %v394, 126
      %v581 = vpop.permute.xlu0 %580
      %582 = vrot.lane.b32.xlu0 %v391, 126
      %v583 = vpop.permute.xlu0 %582
      %584 = vrot.lane.b32.xlu0 %v393, 126
      %v585 = vpop.permute.xlu0 %584
      %586 = vrot.lane.b32.xlu0 %v395, 126
      %v587 = vpop.permute.xlu0 %586
      %vm588 = vcmp.lt.s32.totalorder %v416, 126
      %v589 = vsel %vm588, %v577, %v583
      %v590 = vsel %vm588, %v579, %v585
      %v591 = vsel %vm588, %v581, %v587
      %v592 = vsel %vm588, %v583, %v577
      %v593 = vsel %vm588, %v585, %v579
      %v594 = vsel %vm588, %v587, %v581
      %s595 = scalar_lea.vmem %s3, 24
      %v596 = vld [vmem:[%s595] sm:$0xf]
      %v597 = vld [vmem:[%s595 + $0x4] sm:$0xf]
      %v598 = vld [vmem:[%s595 + $0x8] sm:$0xf]
      %v599 = vpack.c.bf16 %v590, %v589
      %v600 = vpack.c.bf16 %v593, %v592
      %v601 = vpack.c.bf16 %v591, %v591
      %v602 = vpack.c.bf16 %v594, %v594
      %v606 = vunpack.c.l.b16 %v596
      %v607 = vunpack.c.l.b16 %v597
      %v608 = vunpack.c.l.b16 %v598
      %v609 = vpack.c.b16 %v607, %v606
      %v610 = vpack.c.b16 %v608, %v608
      %v612 = vsel %vm440, %v609, 0
      %v615 = vsel %vm440, %v610, 0
      %v618 = vsel %vm447, %v601, 0
      %v621 = vsel %vm447, %v602, 0
      %623 = vmatprep.subr.bf16.mxu0 %v600
      %624 = vmatpush1.bf16.msra.mxu0 %v599
      %625 = vmatprep.subr.bf16.mxu0 %v621
      %626 = vmatpush1.bf16.msra.mxu0 %v618
      %627 = vmatprep.subr.bf16.mxu0 0
      %628 = vmatpush1.bf16.msra.mxu0 0
      %629 = vmatprep.subr.bf16.mxu0 0
      %630 = vmatpush1.bf16.msra.mxu0 0
      %631 = vmatprep.subr.bf16.mxu0 0
      %632 = vmatpush1.bf16.msra.mxu0 0
      %633 = vmatprep.subr.bf16.mxu0 0
      %634 = vmatpush1.bf16.msra.mxu0 0
      %635 = vmatprep.subr.bf16.mxu0 0
      %636 = vmatpush1.bf16.msra.mxu0 0
      %637 = vmatprep.subr.bf16.mxu0 0
      %638 = vmatpush1.bf16.msra.mxu0 0
      %639 = vmatprep.subr.bf16.mxu0 0
      %640 = vmatpush1.bf16.msra.mxu0 0
      %641 = vmatprep.subr.bf16.mxu0 0
      %642 = vmatpush1.bf16.msra.mxu0 0
      %643 = vmatprep.subr.bf16.mxu0 0
      %644 = vmatpush1.bf16.msra.mxu0 0
      %645 = vmatprep.subr.bf16.mxu0 0
      %646 = vmatpush1.bf16.msra.mxu0 0
      %647 = vmatprep.subr.bf16.mxu0 0
      %648 = vmatpush1.bf16.msra.mxu0 0
      %649 = vmatprep.subr.bf16.mxu0 0
      %650 = vmatpush1.bf16.msra.mxu0 0
      %651 = vmatprep.subr.bf16.mxu0 0
      %652 = vmatpush1.bf16.msra.mxu0 0
      %653 = vmatprep.subr.bf16.mxu0 0
      %654 = vmatpush1.bf16.msra.mxu0 0
      %655 = vmatprep.mubr.bf16.mxu0 0
      %656 = vmatmul.mubr.bf16.gmra.mrb[0].mxu0 %v612
      %v657 = vpop.f32.mrb[0].mxu0
      %v658 = vadd.f32 0.0, %v657
      %v659 = vpop.f32.mrb[0].mxu0
      %v660 = vadd.f32 0.0, %v659
      %v661 = vpop.f32.mrb[0].mxu0
      %v662 = vadd.f32 0.0, %v661
      %v663 = vpop.f32.mrb[0].mxu0
      %v664 = vadd.f32 0.0, %v663
      %665 = vmatprep.mubr.bf16.mxu0 0
      %666 = vmatmul.mubr.bf16.gmra.mrb[0].mxu0 %v615
      %v667 = vpop.f32.mrb[0].mxu0
      %v668 = vadd.f32 0.0, %v667
      %v669 = vpop.f32.mrb[0].mxu0
      %v670 = vadd.f32 0.0, %v669
      %v671 = vpop.f32.mrb[0].mxu0
      %v672 = vpop.f32.mrb[0].mxu0
      %673 = vdwg.mxu0
      %v674 = vadd.f32 %v560, %v658
      %v675 = vadd.f32 %v562, %v660
      %v676 = vadd.f32 %v564, %v662
      %v677 = vadd.f32 %v566, %v664
      %v678 = vadd.f32 %v570, %v668
      %v679 = vadd.f32 %v572, %v670
      %680 = vrot.lane.b32.xlu0 %v390, 112
      %v681 = vpop.permute.xlu0 %680
      %682 = vrot.lane.b32.xlu0 %v392, 112
      %v683 = vpop.permute.xlu0 %682
      %684 = vrot.lane.b32.xlu0 %v394, 112
      %v685 = vpop.permute.xlu0 %684
      %686 = vrot.lane.b32.xlu0 %v391, 112
      %v687 = vpop.permute.xlu0 %686
      %688 = vrot.lane.b32.xlu0 %v393, 112
      %v689 = vpop.permute.xlu0 %688
      %690 = vrot.lane.b32.xlu0 %v395, 112
      %v691 = vpop.permute.xlu0 %690
      %vm692 = vcmp.lt.s32.totalorder %v416, 112
      %v693 = vsel %vm692, %v681, %v687
      %v694 = vsel %vm692, %v683, %v689
      %v695 = vsel %vm692, %v685, %v691
      %v696 = vsel %vm692, %v687, %v681
      %v697 = vsel %vm692, %v689, %v683
      %v698 = vsel %vm692, %v691, %v685
      %s699 = scalar_lea.vmem %s3, 36
      %v700 = vld [vmem:[%s699] sm:$0xf]
      %v701 = vld [vmem:[%s699 + $0x4] sm:$0xf]
      %v702 = vld [vmem:[%s699 + $0x8] sm:$0xf]
      %v703 = vpack.c.bf16 %v694, %v693
      %v704 = vpack.c.bf16 %v697, %v696
      %v705 = vpack.c.bf16 %v695, %v695
      %v706 = vpack.c.bf16 %v698, %v698
      %v710 = vunpack.c.l.b16 %v700
      %v711 = vunpack.c.l.b16 %v701
      %v712 = vunpack.c.l.b16 %v702
      %v713 = vpack.c.b16 %v711, %v710
      %v714 = vpack.c.b16 %v712, %v712
      %v716 = vsel %vm440, %v713, 0
      %v719 = vsel %vm440, %v714, 0
      %v722 = vsel %vm447, %v705, 0
      %v725 = vsel %vm447, %v706, 0
      %727 = vmatprep.subr.bf16.mxu0 %v704
      %728 = vmatpush1.bf16.msra.mxu0 %v703
      %729 = vmatprep.subr.bf16.mxu0 %v725
      %730 = vmatpush1.bf16.msra.mxu0 %v722
      %731 = vmatprep.subr.bf16.mxu0 0
      %732 = vmatpush1.bf16.msra.mxu0 0
      %733 = vmatprep.subr.bf16.mxu0 0
      %734 = vmatpush1.bf16.msra.mxu0 0
      %735 = vmatprep.subr.bf16.mxu0 0
      %736 = vmatpush1.bf16.msra.mxu0 0
      %737 = vmatprep.subr.bf16.mxu0 0
      %738 = vmatpush1.bf16.msra.mxu0 0
      %739 = vmatprep.subr.bf16.mxu0 0
      %740 = vmatpush1.bf16.msra.mxu0 0
      %741 = vmatprep.subr.bf16.mxu0 0
      %742 = vmatpush1.bf16.msra.mxu0 0
      %743 = vmatprep.subr.bf16.mxu0 0
      %744 = vmatpush1.bf16.msra.mxu0 0
      %745 = vmatprep.subr.bf16.mxu0 0
      %746 = vmatpush1.bf16.msra.mxu0 0
      %747 = vmatprep.subr.bf16.mxu0 0
      %748 = vmatpush1.bf16.msra.mxu0 0
      %749 = vmatprep.subr.bf16.mxu0 0
      %750 = vmatpush1.bf16.msra.mxu0 0
      %751 = vmatprep.subr.bf16.mxu0 0
      %752 = vmatpush1.bf16.msra.mxu0 0
      %753 = vmatprep.subr.bf16.mxu0 0
      %754 = vmatpush1.bf16.msra.mxu0 0
      %755 = vmatprep.subr.bf16.mxu0 0
      %756 = vmatpush1.bf16.msra.mxu0 0
      %757 = vmatprep.subr.bf16.mxu0 0
      %758 = vmatpush1.bf16.msra.mxu0 0
      %759 = vmatprep.mubr.bf16.mxu0 0
      %760 = vmatmul.mubr.bf16.gmra.mrb[0].mxu0 %v716
      %v761 = vpop.f32.mrb[0].mxu0
      %v762 = vadd.f32 0.0, %v761
      %v763 = vpop.f32.mrb[0].mxu0
      %v764 = vadd.f32 0.0, %v763
      %v765 = vpop.f32.mrb[0].mxu0
      %v766 = vadd.f32 0.0, %v765
      %v767 = vpop.f32.mrb[0].mxu0
      %v768 = vadd.f32 0.0, %v767
      %769 = vmatprep.mubr.bf16.mxu0 0
      %770 = vmatmul.mubr.bf16.gmra.mrb[0].mxu0 %v719
      %v771 = vpop.f32.mrb[0].mxu0
      %v772 = vadd.f32 0.0, %v771
      %v773 = vpop.f32.mrb[0].mxu0
      %v774 = vadd.f32 0.0, %v773
      %v775 = vpop.f32.mrb[0].mxu0
      %v776 = vpop.f32.mrb[0].mxu0
      %777 = vdwg.mxu0
      %v778 = vadd.f32 %v674, %v762
      %v779 = vadd.f32 %v675, %v764
      %v780 = vadd.f32 %v676, %v766
      %v781 = vadd.f32 %v677, %v768
      %v782 = vadd.f32 %v678, %v772
      %v783 = vadd.f32 %v679, %v774
      %784 = vrot.lane.b32.xlu0 %v390, 111
      %v785 = vpop.permute.xlu0 %784
      %786 = vrot.lane.b32.xlu0 %v392, 111
      %v787 = vpop.permute.xlu0 %786
      %788 = vrot.lane.b32.xlu0 %v394, 111
      %v789 = vpop.permute.xlu0 %788
      %790 = vrot.lane.b32.xlu0 %v391, 111
      %v791 = vpop.permute.xlu0 %790
      %792 = vrot.lane.b32.xlu0 %v393, 111
      %v793 = vpop.permute.xlu0 %792
      %794 = vrot.lane.b32.xlu0 %v395, 111
      %v795 = vpop.permute.xlu0 %794
      %vm796 = vcmp.lt.s32.totalorder %v416, 111
      %v797 = vsel %vm796, %v785, %v791
      %v798 = vsel %vm796, %v787, %v793
      %v799 = vsel %vm796, %v789, %v795
      %v800 = vsel %vm796, %v791, %v785
      %v801 = vsel %vm796, %v793, %v787
      %v802 = vsel %vm796, %v795, %v789
      %s803 = scalar_lea.vmem %s3, 48
      %v804 = vld [vmem:[%s803] sm:$0xf]
      %v805 = vld [vmem:[%s803 + $0x4] sm:$0xf]
      %v806 = vld [vmem:[%s803 + $0x8] sm:$0xf]
      %v807 = vpack.c.bf16 %v798, %v797
      %v808 = vpack.c.bf16 %v801, %v800
      %v809 = vpack.c.bf16 %v799, %v799
      %v810 = vpack.c.bf16 %v802, %v802
      %v814 = vunpack.c.l.b16 %v804
      %v815 = vunpack.c.l.b16 %v805
      %v816 = vunpack.c.l.b16 %v806
      %v817 = vpack.c.b16 %v815, %v814
      %v818 = vpack.c.b16 %v816, %v816
      %v820 = vsel %vm440, %v817, 0
      %v823 = vsel %vm440, %v818, 0
      %v826 = vsel %vm447, %v809, 0
      %v829 = vsel %vm447, %v810, 0
      %831 = vmatprep.subr.bf16.mxu0 %v808
      %832 = vmatpush1.bf16.msra.mxu0 %v807
      %833 = vmatprep.subr.bf16.mxu0 %v829
      %834 = vmatpush1.bf16.msra.mxu0 %v826
      %835 = vmatprep.subr.bf16.mxu0 0
      %836 = vmatpush1.bf16.msra.mxu0 0
      %837 = vmatprep.subr.bf16.mxu0 0
      %838 = vmatpush1.bf16.msra.mxu0 0
      %839 = vmatprep.subr.bf16.mxu0 0
      %840 = vmatpush1.bf16.msra.mxu0 0
      %841 = vmatprep.subr.bf16.mxu0 0
      %842 = vmatpush1.bf16.msra.mxu0 0
      %843 = vmatprep.subr.bf16.mxu0 0
      %844 = vmatpush1.bf16.msra.mxu0 0
      %845 = vmatprep.subr.bf16.mxu0 0
      %846 = vmatpush1.bf16.msra.mxu0 0
      %847 = vmatprep.subr.bf16.mxu0 0
      %848 = vmatpush1.bf16.msra.mxu0 0
      %849 = vmatprep.subr.bf16.mxu0 0
      %850 = vmatpush1.bf16.msra.mxu0 0
      %851 = vmatprep.subr.bf16.mxu0 0
      %852 = vmatpush1.bf16.msra.mxu0 0
      %853 = vmatprep.subr.bf16.mxu0 0
      %854 = vmatpush1.bf16.msra.mxu0 0
      %855 = vmatprep.subr.bf16.mxu0 0
      %856 = vmatpush1.bf16.msra.mxu0 0
      %857 = vmatprep.subr.bf16.mxu0 0
      %858 = vmatpush1.bf16.msra.mxu0 0
      %859 = vmatprep.subr.bf16.mxu0 0
      %860 = vmatpush1.bf16.msra.mxu0 0
      %861 = vmatprep.subr.bf16.mxu0 0
      %862 = vmatpush1.bf16.msra.mxu0 0
      %863 = vmatprep.mubr.bf16.mxu0 0
      %864 = vmatmul.mubr.bf16.gmra.mrb[0].mxu0 %v820
      %v865 = vpop.f32.mrb[0].mxu0
      %v866 = vadd.f32 0.0, %v865
      %v867 = vpop.f32.mrb[0].mxu0
      %v868 = vadd.f32 0.0, %v867
      %v869 = vpop.f32.mrb[0].mxu0
      %v870 = vadd.f32 0.0, %v869
      %v871 = vpop.f32.mrb[0].mxu0
      %v872 = vadd.f32 0.0, %v871
      %873 = vmatprep.mubr.bf16.mxu0 0
      %874 = vmatmul.mubr.bf16.gmra.mrb[0].mxu0 %v823
      %v875 = vpop.f32.mrb[0].mxu0
      %v876 = vadd.f32 0.0, %v875
      %v877 = vpop.f32.mrb[0].mxu0
      %v878 = vadd.f32 0.0, %v877
      %v879 = vpop.f32.mrb[0].mxu0
      %v880 = vpop.f32.mrb[0].mxu0
      %881 = vdwg.mxu0
      %v882 = vadd.f32 %v778, %v866
      %v883 = vadd.f32 %v779, %v868
      %v884 = vadd.f32 %v780, %v870
      %v885 = vadd.f32 %v781, %v872
      %v886 = vadd.f32 %v782, %v876
      %v887 = vadd.f32 %v783, %v878
      %888 = vrot.lane.b32.xlu0 %v390, 110
      %v889 = vpop.permute.xlu0 %888
      %890 = vrot.lane.b32.xlu0 %v392, 110
      %v891 = vpop.permute.xlu0 %890
      %892 = vrot.lane.b32.xlu0 %v394, 110
      %v893 = vpop.permute.xlu0 %892
      %894 = vrot.lane.b32.xlu0 %v391, 110
      %v895 = vpop.permute.xlu0 %894
      %896 = vrot.lane.b32.xlu0 %v393, 110
      %v897 = vpop.permute.xlu0 %896
      %898 = vrot.lane.b32.xlu0 %v395, 110
      %v899 = vpop.permute.xlu0 %898
      %vm900 = vcmp.lt.s32.totalorder %v416, 110
      %v901 = vsel %vm900, %v889, %v895
      %v902 = vsel %vm900, %v891, %v897
      %v903 = vsel %vm900, %v893, %v899
      %v904 = vsel %vm900, %v895, %v889
      %v905 = vsel %vm900, %v897, %v891
      %v906 = vsel %vm900, %v899, %v893
      %s907 = scalar_lea.vmem %s3, 60
      %v908 = vld [vmem:[%s907] sm:$0xf]
      %v909 = vld [vmem:[%s907 + $0x4] sm:$0xf]
      %v910 = vld [vmem:[%s907 + $0x8] sm:$0xf]
      %v911 = vpack.c.bf16 %v902, %v901
      %v912 = vpack.c.bf16 %v905, %v904
      %v913 = vpack.c.bf16 %v903, %v903
      %v914 = vpack.c.bf16 %v906, %v906
      %v918 = vunpack.c.l.b16 %v908
      %v919 = vunpack.c.l.b16 %v909
      %v920 = vunpack.c.l.b16 %v910
      %v921 = vpack.c.b16 %v919, %v918
      %v922 = vpack.c.b16 %v920, %v920
      %v924 = vsel %vm440, %v921, 0
      %v927 = vsel %vm440, %v922, 0
      %v930 = vsel %vm447, %v913, 0
      %v933 = vsel %vm447, %v914, 0
      %935 = vmatprep.subr.bf16.mxu0 %v912
      %936 = vmatpush1.bf16.msra.mxu0 %v911
      %937 = vmatprep.subr.bf16.mxu0 %v933
      %938 = vmatpush1.bf16.msra.mxu0 %v930
      %939 = vmatprep.subr.bf16.mxu0 0
      %940 = vmatpush1.bf16.msra.mxu0 0
      %941 = vmatprep.subr.bf16.mxu0 0
      %942 = vmatpush1.bf16.msra.mxu0 0
      %943 = vmatprep.subr.bf16.mxu0 0
      %944 = vmatpush1.bf16.msra.mxu0 0
      %945 = vmatprep.subr.bf16.mxu0 0
      %946 = vmatpush1.bf16.msra.mxu0 0
      %947 = vmatprep.subr.bf16.mxu0 0
      %948 = vmatpush1.bf16.msra.mxu0 0
      %949 = vmatprep.subr.bf16.mxu0 0
      %950 = vmatpush1.bf16.msra.mxu0 0
      %951 = vmatprep.subr.bf16.mxu0 0
      %952 = vmatpush1.bf16.msra.mxu0 0
      %953 = vmatprep.subr.bf16.mxu0 0
      %954 = vmatpush1.bf16.msra.mxu0 0
      %955 = vmatprep.subr.bf16.mxu0 0
      %956 = vmatpush1.bf16.msra.mxu0 0
      %957 = vmatprep.subr.bf16.mxu0 0
      %958 = vmatpush1.bf16.msra.mxu0 0
      %959 = vmatprep.subr.bf16.mxu0 0
      %960 = vmatpush1.bf16.msra.mxu0 0
      %961 = vmatprep.subr.bf16.mxu0 0
      %962 = vmatpush1.bf16.msra.mxu0 0
      %963 = vmatprep.subr.bf16.mxu0 0
      %964 = vmatpush1.bf16.msra.mxu0 0
      %965 = vmatprep.subr.bf16.mxu0 0
      %966 = vmatpush1.bf16.msra.mxu0 0
      %967 = vmatprep.mubr.bf16.mxu0 0
      %968 = vmatmul.mubr.bf16.gmra.mrb[0].mxu0 %v924
      %v969 = vpop.f32.mrb[0].mxu0
      %v970 = vadd.f32 0.0, %v969
      %v971 = vpop.f32.mrb[0].mxu0
      %v972 = vadd.f32 0.0, %v971
      %v973 = vpop.f32.mrb[0].mxu0
      %v974 = vadd.f32 0.0, %v973
      %v975 = vpop.f32.mrb[0].mxu0
      %v976 = vadd.f32 0.0, %v975
      %977 = vmatprep.mubr.bf16.mxu0 0
      %978 = vmatmul.mubr.bf16.gmra.mrb[0].mxu0 %v927
      %v979 = vpop.f32.mrb[0].mxu0
      %v980 = vadd.f32 0.0, %v979
      %v981 = vpop.f32.mrb[0].mxu0
      %v982 = vadd.f32 0.0, %v981
      %v983 = vpop.f32.mrb[0].mxu0
      %v984 = vpop.f32.mrb[0].mxu0
      %985 = vdwg.mxu0
      %v986 = vadd.f32 %v882, %v970
      %v987 = vadd.f32 %v883, %v972
      %v988 = vadd.f32 %v884, %v974
      %v989 = vadd.f32 %v885, %v976
      %v990 = vadd.f32 %v886, %v980
      %v991 = vadd.f32 %v887, %v982
      %992 = vrot.lane.b32.xlu0 %v390, 96
      %v993 = vpop.permute.xlu0 %992
      %994 = vrot.lane.b32.xlu0 %v392, 96
      %v995 = vpop.permute.xlu0 %994
      %996 = vrot.lane.b32.xlu0 %v394, 96
      %v997 = vpop.permute.xlu0 %996
      %998 = vrot.lane.b32.xlu0 %v391, 96
      %v999 = vpop.permute.xlu0 %998
      %1000 = vrot.lane.b32.xlu0 %v393, 96
      %v1001 = vpop.permute.xlu0 %1000
      %1002 = vrot.lane.b32.xlu0 %v395, 96
      %v1003 = vpop.permute.xlu0 %1002
      %vm1004 = vcmp.lt.s32.totalorder %v416, 96
      %v1005 = vsel %vm1004, %v993, %v999
      %v1006 = vsel %vm1004, %v995, %v1001
      %v1007 = vsel %vm1004, %v997, %v1003
      %v1008 = vsel %vm1004, %v999, %v993
      %v1009 = vsel %vm1004, %v1001, %v995
      %v1010 = vsel %vm1004, %v1003, %v997
      %s1011 = scalar_lea.vmem %s3, 72
      %v1012 = vld [vmem:[%s1011] sm:$0xf]
      %v1013 = vld [vmem:[%s1011 + $0x4] sm:$0xf]
      %v1014 = vld [vmem:[%s1011 + $0x8] sm:$0xf]
      %v1015 = vpack.c.bf16 %v1006, %v1005
      %v1016 = vpack.c.bf16 %v1009, %v1008
      %v1017 = vpack.c.bf16 %v1007, %v1007
      %v1018 = vpack.c.bf16 %v1010, %v1010
      %v1022 = vunpack.c.l.b16 %v1012
      %v1023 = vunpack.c.l.b16 %v1013
      %v1024 = vunpack.c.l.b16 %v1014
      %v1025 = vpack.c.b16 %v1023, %v1022
      %v1026 = vpack.c.b16 %v1024, %v1024
      %v1028 = vsel %vm440, %v1025, 0
      %v1031 = vsel %vm440, %v1026, 0
      %v1034 = vsel %vm447, %v1017, 0
      %v1037 = vsel %vm447, %v1018, 0
      %1039 = vmatprep.subr.bf16.mxu0 %v1016
      %1040 = vmatpush1.bf16.msra.mxu0 %v1015
      %1041 = vmatprep.subr.bf16.mxu0 %v1037
      %1042 = vmatpush1.bf16.msra.mxu0 %v1034
      %1043 = vmatprep.subr.bf16.mxu0 0
      %1044 = vmatpush1.bf16.msra.mxu0 0
      %1045 = vmatprep.subr.bf16.mxu0 0
      %1046 = vmatpush1.bf16.msra.mxu0 0
      %1047 = vmatprep.subr.bf16.mxu0 0
      %1048 = vmatpush1.bf16.msra.mxu0 0
      %1049 = vmatprep.subr.bf16.mxu0 0
      %1050 = vmatpush1.bf16.msra.mxu0 0
      %1051 = vmatprep.subr.bf16.mxu0 0
      %1052 = vmatpush1.bf16.msra.mxu0 0
      %1053 = vmatprep.subr.bf16.mxu0 0
      %1054 = vmatpush1.bf16.msra.mxu0 0
      %1055 = vmatprep.subr.bf16.mxu0 0
      %1056 = vmatpush1.bf16.msra.mxu0 0
      %1057 = vmatprep.subr.bf16.mxu0 0
      %1058 = vmatpush1.bf16.msra.mxu0 0
      %1059 = vmatprep.subr.bf16.mxu0 0
      %1060 = vmatpush1.bf16.msra.mxu0 0
      %1061 = vmatprep.subr.bf16.mxu0 0
      %1062 = vmatpush1.bf16.msra.mxu0 0
      %1063 = vmatprep.subr.bf16.mxu0 0
      %1064 = vmatpush1.bf16.msra.mxu0 0
      %1065 = vmatprep.subr.bf16.mxu0 0
      %1066 = vmatpush1.bf16.msra.mxu0 0
      %1067 = vmatprep.subr.bf16.mxu0 0
      %1068 = vmatpush1.bf16.msra.mxu0 0
      %1069 = vmatprep.subr.bf16.mxu0 0
      %1070 = vmatpush1.bf16.msra.mxu0 0
      %1071 = vmatprep.mubr.bf16.mxu0 0
      %1072 = vmatmul.mubr.bf16.gmra.mrb[0].mxu0 %v1028
      %v1073 = vpop.f32.mrb[0].mxu0
      %v1074 = vadd.f32 0.0, %v1073
      %v1075 = vpop.f32.mrb[0].mxu0
      %v1076 = vadd.f32 0.0, %v1075
      %v1077 = vpop.f32.mrb[0].mxu0
      %v1078 = vadd.f32 0.0, %v1077
      %v1079 = vpop.f32.mrb[0].mxu0
      %v1080 = vadd.f32 0.0, %v1079
      %1081 = vmatprep.mubr.bf16.mxu0 0
      %1082 = vmatmul.mubr.bf16.gmra.mrb[0].mxu0 %v1031
      %v1083 = vpop.f32.mrb[0].mxu0
      %v1084 = vadd.f32 0.0, %v1083
      %v1085 = vpop.f32.mrb[0].mxu0
      %v1086 = vadd.f32 0.0, %v1085
      %v1087 = vpop.f32.mrb[0].mxu0
      %v1088 = vpop.f32.mrb[0].mxu0
      %1089 = vdwg.mxu0
      %v1090 = vadd.f32 %v986, %v1074
      %v1091 = vadd.f32 %v987, %v1076
      %v1092 = vadd.f32 %v988, %v1078
      %v1093 = vadd.f32 %v989, %v1080
      %v1094 = vadd.f32 %v990, %v1084
      %v1095 = vadd.f32 %v991, %v1086
      %1096 = vrot.lane.b32.xlu0 %v390, 95
      %v1097 = vpop.permute.xlu0 %1096
      %1098 = vrot.lane.b32.xlu0 %v392, 95
      %v1099 = vpop.permute.xlu0 %1098
      %1100 = vrot.lane.b32.xlu0 %v394, 95
      %v1101 = vpop.permute.xlu0 %1100
      %1102 = vrot.lane.b32.xlu0 %v391, 95
      %v1103 = vpop.permute.xlu0 %1102
      %1104 = vrot.lane.b32.xlu0 %v393, 95
      %v1105 = vpop.permute.xlu0 %1104
      %1106 = vrot.lane.b32.xlu0 %v395, 95
      %v1107 = vpop.permute.xlu0 %1106
      %vm1108 = vcmp.lt.s32.totalorder %v416, 95
      %v1109 = vsel %vm1108, %v1097, %v1103
      %v1110 = vsel %vm1108, %v1099, %v1105
      %v1111 = vsel %vm1108, %v1101, %v1107
      %v1112 = vsel %vm1108, %v1103, %v1097
      %v1113 = vsel %vm1108, %v1105, %v1099
      %v1114 = vsel %vm1108, %v1107, %v1101
      %s1115 = scalar_lea.vmem %s3, 84
      %v1116 = vld [vmem:[%s1115] sm:$0xf]
      %v1117 = vld [vmem:[%s1115 + $0x4] sm:$0xf]
      %v1118 = vld [vmem:[%s1115 + $0x8] sm:$0xf]
      %v1119 = vpack.c.bf16 %v1110, %v1109
      %v1120 = vpack.c.bf16 %v1113, %v1112
      %v1121 = vpack.c.bf16 %v1111, %v1111
      %v1122 = vpack.c.bf16 %v1114, %v1114
      %v1126 = vunpack.c.l.b16 %v1116
      %v1127 = vunpack.c.l.b16 %v1117
      %v1128 = vunpack.c.l.b16 %v1118
      %v1129 = vpack.c.b16 %v1127, %v1126
      %v1130 = vpack.c.b16 %v1128, %v1128
      %v1132 = vsel %vm440, %v1129, 0
      %v1135 = vsel %vm440, %v1130, 0
      %v1138 = vsel %vm447, %v1121, 0
      %v1141 = vsel %vm447, %v1122, 0
      %1143 = vmatprep.subr.bf16.mxu0 %v1120
      %1144 = vmatpush1.bf16.msra.mxu0 %v1119
      %1145 = vmatprep.subr.bf16.mxu0 %v1141
      %1146 = vmatpush1.bf16.msra.mxu0 %v1138
      %1147 = vmatprep.subr.bf16.mxu0 0
      %1148 = vmatpush1.bf16.msra.mxu0 0
      %1149 = vmatprep.subr.bf16.mxu0 0
      %1150 = vmatpush1.bf16.msra.mxu0 0
      %1151 = vmatprep.subr.bf16.mxu0 0
      %1152 = vmatpush1.bf16.msra.mxu0 0
      %1153 = vmatprep.subr.bf16.mxu0 0
      %1154 = vmatpush1.bf16.msra.mxu0 0
      %1155 = vmatprep.subr.bf16.mxu0 0
      %1156 = vmatpush1.bf16.msra.mxu0 0
      %1157 = vmatprep.subr.bf16.mxu0 0
      %1158 = vmatpush1.bf16.msra.mxu0 0
      %1159 = vmatprep.subr.bf16.mxu0 0
      %1160 = vmatpush1.bf16.msra.mxu0 0
      %1161 = vmatprep.subr.bf16.mxu0 0
      %1162 = vmatpush1.bf16.msra.mxu0 0
      %1163 = vmatprep.subr.bf16.mxu0 0
      %1164 = vmatpush1.bf16.msra.mxu0 0
      %1165 = vmatprep.subr.bf16.mxu0 0
      %1166 = vmatpush1.bf16.msra.mxu0 0
      %1167 = vmatprep.subr.bf16.mxu0 0
      %1168 = vmatpush1.bf16.msra.mxu0 0
      %1169 = vmatprep.subr.bf16.mxu0 0
      %1170 = vmatpush1.bf16.msra.mxu0 0
      %1171 = vmatprep.subr.bf16.mxu0 0
      %1172 = vmatpush1.bf16.msra.mxu0 0
      %1173 = vmatprep.subr.bf16.mxu0 0
      %1174 = vmatpush1.bf16.msra.mxu0 0
      %1175 = vmatprep.mubr.bf16.mxu0 0
      %1176 = vmatmul.mubr.bf16.gmra.mrb[0].mxu0 %v1132
      %v1177 = vpop.f32.mrb[0].mxu0
      %v1178 = vadd.f32 0.0, %v1177
      %v1179 = vpop.f32.mrb[0].mxu0
      %v1180 = vadd.f32 0.0, %v1179
      %v1181 = vpop.f32.mrb[0].mxu0
      %v1182 = vadd.f32 0.0, %v1181
      %v1183 = vpop.f32.mrb[0].mxu0
      %v1184 = vadd.f32 0.0, %v1183
      %1185 = vmatprep.mubr.bf16.mxu0 0
      %1186 = vmatmul.mubr.bf16.gmra.mrb[0].mxu0 %v1135
      %v1187 = vpop.f32.mrb[0].mxu0
      %v1188 = vadd.f32 0.0, %v1187
      %v1189 = vpop.f32.mrb[0].mxu0
      %v1190 = vadd.f32 0.0, %v1189
      %v1191 = vpop.f32.mrb[0].mxu0
      %v1192 = vpop.f32.mrb[0].mxu0
      %1193 = vdwg.mxu0
      %v1194 = vadd.f32 %v1090, %v1178
      %v1195 = vadd.f32 %v1091, %v1180
      %v1196 = vadd.f32 %v1092, %v1182
      %v1197 = vadd.f32 %v1093, %v1184
      %v1198 = vadd.f32 %v1094, %v1188
      %v1199 = vadd.f32 %v1095, %v1190
      %1200 = vrot.lane.b32.xlu0 %v390, 94
      %v1201 = vpop.permute.xlu0 %1200
      %1202 = vrot.lane.b32.xlu0 %v392, 94
      %v1203 = vpop.permute.xlu0 %1202
      %1204 = vrot.lane.b32.xlu0 %v394, 94
      %v1205 = vpop.permute.xlu0 %1204
      %1206 = vrot.lane.b32.xlu0 %v391, 94
      %v1207 = vpop.permute.xlu0 %1206
      %1208 = vrot.lane.b32.xlu0 %v393, 94
      %v1209 = vpop.permute.xlu0 %1208
      %1210 = vrot.lane.b32.xlu0 %v395, 94
      %v1211 = vpop.permute.xlu0 %1210
      %vm1212 = vcmp.lt.s32.totalorder %v416, 94
      %v1213 = vsel %vm1212, %v1201, %v1207
      %v1214 = vsel %vm1212, %v1203, %v1209
      %v1215 = vsel %vm1212, %v1205, %v1211
      %v1216 = vsel %vm1212, %v1207, %v1201
      %v1217 = vsel %vm1212, %v1209, %v1203
      %v1218 = vsel %vm1212, %v1211, %v1205
      %s1219 = scalar_lea.vmem %s3, 96
      %v1220 = vld [vmem:[%s1219] sm:$0xf]
      %v1221 = vld [vmem:[%s1219 + $0x4] sm:$0xf]
      %v1222 = vld [vmem:[%s1219 + $0x8] sm:$0xf]
      %v1223 = vpack.c.bf16 %v1214, %v1213
      %v1224 = vpack.c.bf16 %v1217, %v1216
      %v1225 = vpack.c.bf16 %v1215, %v1215
      %v1226 = vpack.c.bf16 %v1218, %v1218
      %v1230 = vunpack.c.l.b16 %v1220
      %v1231 = vunpack.c.l.b16 %v1221
      %v1232 = vunpack.c.l.b16 %v1222
      %v1233 = vpack.c.b16 %v1231, %v1230
      %v1234 = vpack.c.b16 %v1232, %v1232
      %v1236 = vsel %vm440, %v1233, 0
      %v1239 = vsel %vm440, %v1234, 0
      %v1242 = vsel %vm447, %v1225, 0
      %v1245 = vsel %vm447, %v1226, 0
      %1247 = vmatprep.subr.bf16.mxu0 %v1224
      %1248 = vmatpush1.bf16.msra.mxu0 %v1223
      %1249 = vmatprep.subr.bf16.mxu0 %v1245
      %1250 = vmatpush1.bf16.msra.mxu0 %v1242
      %1251 = vmatprep.subr.bf16.mxu0 0
      %1252 = vmatpush1.bf16.msra.mxu0 0
      %1253 = vmatprep.subr.bf16.mxu0 0
      %1254 = vmatpush1.bf16.msra.mxu0 0
      %1255 = vmatprep.subr.bf16.mxu0 0
      %1256 = vmatpush1.bf16.msra.mxu0 0
      %1257 = vmatprep.subr.bf16.mxu0 0
      %1258 = vmatpush1.bf16.msra.mxu0 0
      %1259 = vmatprep.subr.bf16.mxu0 0
      %1260 = vmatpush1.bf16.msra.mxu0 0
      %1261 = vmatprep.subr.bf16.mxu0 0
      %1262 = vmatpush1.bf16.msra.mxu0 0
      %1263 = vmatprep.subr.bf16.mxu0 0
      %1264 = vmatpush1.bf16.msra.mxu0 0
      %1265 = vmatprep.subr.bf16.mxu0 0
      %1266 = vmatpush1.bf16.msra.mxu0 0
      %1267 = vmatprep.subr.bf16.mxu0 0
      %1268 = vmatpush1.bf16.msra.mxu0 0
      %1269 = vmatprep.subr.bf16.mxu0 0
      %1270 = vmatpush1.bf16.msra.mxu0 0
      %1271 = vmatprep.subr.bf16.mxu0 0
      %1272 = vmatpush1.bf16.msra.mxu0 0
      %1273 = vmatprep.subr.bf16.mxu0 0
      %1274 = vmatpush1.bf16.msra.mxu0 0
      %1275 = vmatprep.subr.bf16.mxu0 0
      %1276 = vmatpush1.bf16.msra.mxu0 0
      %1277 = vmatprep.subr.bf16.mxu0 0
      %1278 = vmatpush1.bf16.msra.mxu0 0
      %1279 = vmatprep.mubr.bf16.mxu0 0
      %1280 = vmatmul.mubr.bf16.gmra.mrb[0].mxu0 %v1236
      %v1281 = vpop.f32.mrb[0].mxu0
      %v1282 = vadd.f32 0.0, %v1281
      %v1283 = vpop.f32.mrb[0].mxu0
      %v1284 = vadd.f32 0.0, %v1283
      %v1285 = vpop.f32.mrb[0].mxu0
      %v1286 = vadd.f32 0.0, %v1285
      %v1287 = vpop.f32.mrb[0].mxu0
      %v1288 = vadd.f32 0.0, %v1287
      %1289 = vmatprep.mubr.bf16.mxu0 0
      %1290 = vmatmul.mubr.bf16.gmra.mrb[0].mxu0 %v1239
      %v1291 = vpop.f32.mrb[0].mxu0
      %v1292 = vadd.f32 0.0, %v1291
      %v1293 = vpop.f32.mrb[0].mxu0
      %v1294 = vadd.f32 0.0, %v1293
      %v1295 = vpop.f32.mrb[0].mxu0
      %v1296 = vpop.f32.mrb[0].mxu0
      %1297 = vdwg.mxu0
      %v1298 = vadd.f32 %v1194, %v1282
      %v1299 = vadd.f32 %v1195, %v1284
      %v1300 = vadd.f32 %v1196, %v1286
      %v1301 = vadd.f32 %v1197, %v1288
      %v1302 = vadd.f32 %v1198, %v1292
      %v1303 = vadd.f32 %v1199, %v1294
      %v1304 = vld [vmem:[%s4] sm:$0xff]
      %v1305 = vld [vmem:[%s4 + $0x8] sm:$0xff]
      %v1306 = vld [vmem:[%s4 + $0x10] sm:$0xff]
      %1308 = vset.pattern.permute.xlu0 0
      %1309 = vperm.xlu0 %1308, %v1304
      %v1310 = vpop.permute.xlu0 %1309
      %1313 = vset.pattern.permute.xlu0 0
      %1314 = vperm.xlu0 %1313, %v1305
      %v1315 = vpop.permute.xlu0 %1314
      %1318 = vset.pattern.permute.xlu0 0
      %1319 = vperm.xlu0 %1318, %v1306
      %v1320 = vpop.permute.xlu0 %1319
      %v1322 = vadd.f32 %v1298, %v1310
      %v1323 = vadd.f32 %v1299, %v1310
      %v1324 = vadd.f32 %v1300, %v1315
      %v1325 = vadd.f32 %v1301, %v1315
      %v1326 = vadd.f32 %v1302, %v1320
      %v1327 = vadd.f32 %v1303, %v1320
      %v1328 = vmax.f32 %v1322, 0.0
      %v1329 = vmax.f32 %v1323, 0.0
      %v1330 = vmax.f32 %v1324, 0.0
      %v1331 = vmax.f32 %v1325, 0.0
      %v1332 = vmax.f32 %v1326, 0.0
      %v1333 = vmax.f32 %v1327, 0.0
      %v1334 = vmin.f32 %v1328, 6.0
      %v1335 = vmin.f32 %v1329, 6.0
      %v1336 = vmin.f32 %v1330, 6.0
      %v1337 = vmin.f32 %v1331, 6.0
      %v1338 = vmin.f32 %v1332, 6.0
      %v1339 = vmin.f32 %v1333, 6.0
      %v1340 = vld [vmem:[%s5] sm:$0xf]
      %v1341 = vpack.c.bf16 %v1336, %v1334
      %v1342 = vpack.c.bf16 %v1337, %v1335
      %v1343 = vpack.c.bf16 %v1338, %v1338
      %v1344 = vpack.c.bf16 %v1339, %v1339
      %v1345 = vld [vmem:[%s6] sm:$0xff]
      %1347 = vset.pattern.permute.xlu0 0
      %1348 = vperm.xlu0 %1347, %v1345
      %v1349 = vpop.permute.xlu0 %1348
      %v1352 = vsel %vm440, %v1340, 0
      %v1355 = vsel %vm447, %v1343, 0
      %v1358 = vsel %vm447, %v1344, 0
      %1360 = vmatprep.subr.bf16.mxu0 %v1342
      %1361 = vmatpush1.bf16.msra.mxu0 %v1341
      %1362 = vmatprep.subr.bf16.mxu0 %v1358
      %1363 = vmatpush1.bf16.msra.mxu0 %v1355
      %1364 = vmatprep.subr.bf16.mxu0 0
      %1365 = vmatpush1.bf16.msra.mxu0 0
      %1366 = vmatprep.subr.bf16.mxu0 0
      %1367 = vmatpush1.bf16.msra.mxu0 0
      %1368 = vmatprep.subr.bf16.mxu0 0
      %1369 = vmatpush1.bf16.msra.mxu0 0
      %1370 = vmatprep.subr.bf16.mxu0 0
      %1371 = vmatpush1.bf16.msra.mxu0 0
      %1372 = vmatprep.subr.bf16.mxu0 0
      %1373 = vmatpush1.bf16.msra.mxu0 0
      %1374 = vmatprep.subr.bf16.mxu0 0
      %1375 = vmatpush1.bf16.msra.mxu0 0
      %1376 = vmatprep.subr.bf16.mxu0 0
      %1377 = vmatpush1.bf16.msra.mxu0 0
      %1378 = vmatprep.subr.bf16.mxu0 0
      %1379 = vmatpush1.bf16.msra.mxu0 0
      %1380 = vmatprep.subr.bf16.mxu0 0
      %1381 = vmatpush1.bf16.msra.mxu0 0
      %1382 = vmatprep.subr.bf16.mxu0 0
      %1383 = vmatpush1.bf16.msra.mxu0 0
      %1384 = vmatprep.subr.bf16.mxu0 0
      %1385 = vmatpush1.bf16.msra.mxu0 0
      %1386 = vmatprep.subr.bf16.mxu0 0
      %1387 = vmatpush1.bf16.msra.mxu0 0
      %1388 = vmatprep.subr.bf16.mxu0 0
      %1389 = vmatpush1.bf16.msra.mxu0 0
      %1390 = vmatprep.subr.bf16.mxu0 0
      %1391 = vmatpush1.bf16.msra.mxu0 0
      %1392 = vmatprep.mubr.bf16.mxu0 0
      %1393 = vmatmul.mubr.bf16.gmra.mrb[0].mxu0 %v1352
      %v1394 = vpop.f32.mrb[0].mxu0
      %v1395 = vadd.f32 %v1349, %v1394
      %v1396 = vpop.f32.mrb[0].mxu0
      %v1397 = vadd.f32 %v1349, %v1396
      %v1398 = vpop.f32.mrb[0].mxu0
      %v1399 = vpop.f32.mrb[0].mxu0
      %1400 = vdwg.mxu0
      %v1401 = vmax.f32 %v1395, 0.0
      %v1402 = vmax.f32 %v1397, 0.0
      %v1403 = vmin.f32 %v1401, 6.0
      %v1404 = vmin.f32 %v1402, 6.0
      %1405 = vst [vmem:[%s278] sm:$0xff] %v1403
      %1406 = vst [vmem:[%s278 + $0x8] sm:$0xff] %v1404
      %p1407 = scmp.lt.s32.totalorder %s18, 1
      %s1408 = scalar_select %p1407, %s18, 1
      %s1409 = smul.addr %s1408, 2
      %s1410 = smul.addr %s1409, 8
      %s1411 = scalar_lea.vmem %s7, %s1410
      // Predicated region
      $region49: #{inverted_residual_forward.1} parent=47 // pred_check
        %p1412 = pneg %p188
      $region50: #{inverted_residual_forward.1} parent=47 // pred_check_branch
        %1414 = sbr.rel (%p1412) target = $region52
      $region51: #{inverted_residual_forward.1} parent=47 // pred_region
        _
      $region52: #{inverted_residual_forward.1} parent=47 // pred_fallthru
        _
    $region48: #{inverted_residual_forward.1} parent=5 // pred_fallthru
      _
    %p1415 = scmp.le.s32.totalorder 2, %s13
    // Predicated region
    $region53: #{inverted_residual_forward.1} parent=5 // pred_check
      %p1416 = pneg %p1415
    $region54: #{inverted_residual_forward.1} parent=5 // pred_check_branch
      %1418 = sbr.rel (%p1416) target = $region56
    $region55: #{inverted_residual_forward.1} parent=5 // pred_region
      %s1419 = ssub.s32 %s13, 2
      // Predicated region
      $region57: #{inverted_residual_forward.1} parent=55 // pred_check
        %p1420 = pneg %p194
      $region58: #{inverted_residual_forward.1} parent=55 // pred_check_branch
        %1422 = sbr.rel (%p1420) target = $region60
      $region59: #{inverted_residual_forward.1} parent=55 // pred_region
        %p1423 = scmp.lt.s32.totalorder %s19, 1
        %s1424 = scalar_select %p1423, %s19, 1
        %s1425 = smul.addr %s1424, 2
        %s1426 = smul.addr %s1425, 8
        %s1427 = scalar_lea.vmem %s7, %s1426
      $region60: #{inverted_residual_forward.1} parent=55 // pred_fallthru
        _
    $region56: #{inverted_residual_forward.1} parent=5 // pred_fallthru
      _
  $region6: #{inverted_residual_forward.1} parent=0 // loop_footer
    %s17 = sadd.s32 1, %s13
  $region7: #{inverted_residual_forward.1} parent=0 // loop_footer_branch
    %12 = sbr.rel target = $region3
  $region8: #{inverted_residual_forward.1} parent=0 // loop_exit
    _

</llo_original>
